<compile_context>
chip_gen: v5e
topology: v5e:2x2
jax: 0.10.0
libtpu: 0.0.40
codegen_flags: <defaults>
</compile_context>

<pallas_src>
import functools
import numpy as np
import jax
import jax.numpy as jnp
from jax import lax
from jax.experimental import pallas as pl
from jax.experimental.pallas import tpu as pltpu


def _tpu_generation():
    """Best-effort TPU generation sniffing: 'v5' / 'v6' / 'v7' / None."""
    try:
        kind = jax.devices()[0].device_kind.lower()
    except Exception:
        return None
    for g in ("v7", "v6", "v5"):
        if g in kind:
            return g
    return None


def _lstm_chunk_kernel(x_ref, wih_ref, whh_ref, b_ref, *refs,
                       seq_len, emit_hseq, mask_tail, gate_dtype, unroll):
    """One LSTM layer over one (batch tile, time chunk) grid cell.

    Grid: (batch_tiles [parallel], time_chunks [arbitrary]).

    x_ref   : (Tc, Bt, I)   bf16/f32   raw layer input chunk
    wih_ref : (4, I, H)     bf16/f32   per-gate input weights (resident)
    whh_ref : (4, H, H)     bf16/f32   per-gate recurrent weights (resident)
    b_ref   : (4, 1, H)     f32        b_ih + b_hh, per gate (resident)
    hseq_ref: (Tc, Bt, H)              per-step hidden (only if emit_hseq)
    hout_ref: (Bt, H)       f32        final hidden (written at last chunk)
    cout_ref: (Bt, H)       f32        final cell   (written at last chunk)
    h_sc/c_sc: (Bt, H)      f32        carries across time chunks
    """
    if emit_hseq:
        hseq_ref, hout_ref, cout_ref, h_sc, c_sc = refs
    else:
        hseq_ref = None
        hout_ref, cout_ref, h_sc, c_sc = refs

    tc_idx = pl.program_id(1)

    @pl.when(tc_idx == 0)
    def _():
        # h0 = c0 = zeros, per the PyTorch forward.
        h_sc[...] = jnp.zeros_like(h_sc)
        c_sc[...] = jnp.zeros_like(c_sc)

    Tc = x_ref.shape[0]
    Bt, H = h_sc.shape
    mm_dtype = whh_ref.dtype
    base = tc_idx * Tc

    # Per-gate weight / bias loads, hoisted out of the serial loop (static
    # leading-index views; biases broadcast once, not per unrolled step).
    wih = [wih_ref[k] for k in range(4)]                       # each (I, H)
    whh = [whh_ref[k] for k in range(4)]                       # each (H, H)
    bias = [jnp.broadcast_to(b_ref[k], (Bt, H)) for k in range(4)]

    gate_is_f32 = jnp.dtype(gate_dtype) == jnp.dtype(jnp.float32)

    def _act(fn, g):
        # bf16 EUP path on v6e/v7x; f32 elsewhere (v5e has no bf16 EUP).
        if gate_is_f32:
            return fn(g)
        return fn(g.astype(gate_dtype)).astype(jnp.float32)

    def step(t, carry):
        h_prev, c_prev = carry                                 # f32 (Bt, H)
        x_t = x_ref[t]                                         # (Bt, I)
        h_mm = h_prev.astype(mm_dtype)

        def gate(k):
            # Fused input + recurrent projection for gate k; each gate is its
            # own lane-aligned (Bt, H) tile (no sub-128-lane slicing).
            return (jnp.dot(x_t, wih[k], preferred_element_type=jnp.float32)
                    + jnp.dot(h_mm, whh[k], preferred_element_type=jnp.float32)
                    + bias[k])

        i_g = _act(jax.nn.sigmoid, gate(0))
        f_g = _act(jax.nn.sigmoid, gate(1))
        g_g = _act(jnp.tanh, gate(2))
        o_g = _act(jax.nn.sigmoid, gate(3))

        c_new = f_g * c_prev + i_g * g_g                       # f32 update
        h_new = o_g * _act(jnp.tanh, c_new)

        if mask_tail:
            # Only compiled when T % Tc != 0: freeze carries on padded steps.
            valid = base + t < seq_len
            h_new = jnp.where(valid, h_new, h_prev)
            c_new = jnp.where(valid, c_new, c_prev)

        if hseq_ref is not None:
            hseq_ref[t] = h_new.astype(hseq_ref.dtype)
        return h_new, c_new

    h_fin, c_fin = lax.fori_loop(0, Tc, step, (h_sc[...], c_sc[...]),
                                 unroll=unroll)
    h_sc[...] = h_fin
    c_sc[...] = c_fin

    @pl.when(tc_idx == pl.num_programs(1) - 1)
    def _():
        hout_ref[...] = h_fin.astype(hout_ref.dtype)
        cout_ref[...] = c_fin.astype(cout_ref.dtype)


def _run_lstm_layer(x_tm, w_ih_g, w_hh_g, bias_g, *, emit_hseq, hseq_dtype,
                    time_chunk, batch_tile, gate_dtype, unroll,
                    vmem_limit_bytes):
    """x_tm: (T, B, I) time-major layer input. Returns (h_seq|None, h_T, c_T)."""
    T, B, I = x_tm.shape
    H = w_hh_g.shape[-1]
    Bt = B if batch_tile is None else min(batch_tile, B)
    Tc = min(time_chunk, T)
    n_bt = pl.cdiv(B, Bt)
    n_tc = pl.cdiv(T, Tc)
    mask_tail = (T % Tc) != 0
    unroll = min(unroll, Tc)

    out_shape = []
    out_specs = []
    if emit_hseq:
        out_shape.append(jax.ShapeDtypeStruct((T, B, H), hseq_dtype))
        out_specs.append(pl.BlockSpec((Tc, Bt, H), lambda b, t: (t, b, 0)))
    out_shape += [jax.ShapeDtypeStruct((B, H), jnp.float32),   # final h
                  jax.ShapeDtypeStruct((B, H), jnp.float32)]   # final c
    out_specs += [pl.BlockSpec((Bt, H), lambda b, t: (b, 0)),
                  pl.BlockSpec((Bt, H), lambda b, t: (b, 0))]

    # NOTE: the weight / bias blocks have constant index maps, so Pallas never
    # re-fetches them across the grid; for very large H a pl.Buffered(1)
    # pipeline_mode would additionally collapse their double buffer.
    grid_spec = pltpu.PrefetchScalarGridSpec(
        num_scalar_prefetch=0,
        grid=(n_bt, n_tc),
        in_specs=[
            pl.BlockSpec((Tc, Bt, I), lambda b, t: (t, b, 0)),     # x chunk
            pl.BlockSpec(w_ih_g.shape, lambda b, t: (0, 0, 0)),    # W_ih (4,I,H)
            pl.BlockSpec(w_hh_g.shape, lambda b, t: (0, 0, 0)),    # W_hh (4,H,H)
            pl.BlockSpec(bias_g.shape, lambda b, t: (0, 0, 0)),    # bias (4,1,H)
        ],
        out_specs=out_specs,
        scratch_shapes=[
            pltpu.VMEM((Bt, H), jnp.float32),                      # h carry
            pltpu.VMEM((Bt, H), jnp.float32),                      # c carry
        ],
    )

    kernel = functools.partial(_lstm_chunk_kernel, seq_len=T,
                               emit_hseq=emit_hseq, mask_tail=mask_tail,
                               gate_dtype=gate_dtype, unroll=unroll)
    outs = pl.pallas_call(
        kernel,
        out_shape=tuple(out_shape),
        grid_spec=grid_spec,
        compiler_params=pltpu.CompilerParams(
            # batch tiles are independent (megacore on v7x); time is serial.
            dimension_semantics=("parallel", "arbitrary"),
            vmem_limit_bytes=vmem_limit_bytes),
    )(x_tm, w_ih_g, w_hh_g, bias_g)

    if emit_hseq:
        h_seq, h_T, c_T = outs
    else:
        h_seq, (h_T, c_T) = None, outs
    return h_seq, h_T, c_T


def encoder_forward(x, params, *, matmul_dtype=jnp.bfloat16, time_chunk=None,
                    batch_tile=None, gate_dtype=None, unroll=8):
    """x: (batch, seq, input_size). Returns (hidden, cell):
       each (num_layers, batch, hidden_size), like nn.LSTM with zero init."""
    gen = _tpu_generation()

    # Generation-aware defaults.
    if time_chunk is None:
        time_chunk = 64 if gen in ("v5", "v6") else 32          # v7x: 64MiB VMEM
    if gen == "v7":
        vmem_limit_bytes = 48 * 1024 * 1024
    elif gen in ("v5", "v6"):
        vmem_limit_bytes = 96 * 1024 * 1024                     # 128MiB physical
    else:
        vmem_limit_bytes = 64 * 1024 * 1024
    if gate_dtype is None:
        if jnp.dtype(matmul_dtype) == jnp.dtype(jnp.float32):
            gate_dtype = jnp.float32
        else:
            # bf16 EUP exists on v6e/v7x; v5e (and unknown) stay f32.
            gate_dtype = jnp.bfloat16 if gen in ("v6", "v7") else jnp.float32

    x_tm = jnp.transpose(x, (1, 0, 2)).astype(matmul_dtype)     # (T, B, I)
    T, B, _ = x_tm.shape

    if batch_tile is None:
        # Split the parallel batch axis only on v7x (2 TCs); single-TC chips
        # keep one big tile (grid is a serial loop there).
        if gen == "v7" and B >= 16 and B % 16 == 0:
            batch_tile = B // 2
        else:
            batch_tile = B

    num_layers = len(params)
    layer_in = x_tm
    h_finals, c_finals = [], []
    for li, (w_ih, w_hh, b_ih, b_hh) in enumerate(params):
        H = w_hh.shape[1]
        in_dim = w_ih.shape[1]
        # Per-gate weight layout: [k] = W_k^T, so every gate is a lane-aligned
        # (.., H) tile and no (Bt, 4H) slicing happens inside the kernel.
        w_ih_g = jnp.transpose(w_ih.reshape(4, H, in_dim), (0, 2, 1)) \
                    .astype(matmul_dtype)                        # (4, in, H)
        w_hh_g = jnp.transpose(w_hh.reshape(4, H, H), (0, 2, 1)) \
                    .astype(matmul_dtype)                        # (4, H, H)
        bias_g = (b_ih + b_hh).reshape(4, 1, H).astype(jnp.float32)

        last = (li == num_layers - 1)
        h_seq, h_T, c_T = _run_lstm_layer(
            layer_in, w_ih_g, w_hh_g, bias_g,
            emit_hseq=not last,              # top layer's h_seq is never used
            hseq_dtype=matmul_dtype,         # inter-layer activations
            time_chunk=time_chunk, batch_tile=batch_tile,
            gate_dtype=gate_dtype, unroll=unroll,
            vmem_limit_bytes=vmem_limit_bytes)
        h_finals.append(h_T)
        c_finals.append(c_T)
        if not last:
            layer_in = h_seq
    return jnp.stack(h_finals, axis=0), jnp.stack(c_finals, axis=0)


def init_encoder_params(key, input_size, hidden_size, num_layers):
    """Deterministic init mimicking nn.LSTM: U(-1/sqrt(H), 1/sqrt(H))."""
    params = []
    bound = 1.0 / np.sqrt(hidden_size)
    for layer in range(num_layers):
        in_dim = input_size if layer == 0 else hidden_size
        key, k1, k2, k3, k4 = jax.random.split(key, 5)
        w_ih = jax.random.uniform(k1, (4 * hidden_size, in_dim),
                                  jnp.float32, -bound, bound)
        w_hh = jax.random.uniform(k2, (4 * hidden_size, hidden_size),
                                  jnp.float32, -bound, bound)
        b_ih = jax.random.uniform(k3, (4 * hidden_size,),
                                  jnp.float32, -bound, bound)
        b_hh = jax.random.uniform(k4, (4 * hidden_size,),
                                  jnp.float32, -bound, bound)
        params.append((w_ih, w_hh, b_ih, b_hh))
    return params


def _reference_forward(x, params):
    """Pure-JAX f32 LSTM reference (same math) for a correctness check."""
    x_tm = jnp.transpose(x, (1, 0, 2)).astype(jnp.float32)
    B = x.shape[0]
    h_finals, c_finals = [], []
    layer_in = x_tm
    for (w_ih, w_hh, b_ih, b_hh) in params:
        H = w_hh.shape[1]

        def step(carry, x_t):
            h, c = carry
            g = x_t @ w_ih.T + h @ w_hh.T + b_ih + b_hh
            i = jax.nn.sigmoid(g[:, 0 * H:1 * H])
            f = jax.nn.sigmoid(g[:, 1 * H:2 * H])
            gg = jnp.tanh(g[:, 2 * H:3 * H])
            o = jax.nn.sigmoid(g[:, 3 * H:4 * H])
            c2 = f * c + i * gg
            h2 = o * jnp.tanh(c2)
            return (h2, c2), h2

        init = (jnp.zeros((B, H), jnp.float32), jnp.zeros((B, H), jnp.float32))
        (h_T, c_T), h_seq = lax.scan(step, init, layer_in)
        h_finals.append(h_T)
        c_finals.append(c_T)
        layer_in = h_seq
    return jnp.stack(h_finals), jnp.stack(c_finals)


if __name__ == "__main__":
    batch, seq_len, input_size, hidden_size, num_layers = 2, 8, 16, 32, 2

    key = jax.random.PRNGKey(0)
    key, xk = jax.random.split(key)
    x = jax.random.normal(xk, (batch, seq_len, input_size), jnp.float32)
    params = init_encoder_params(key, input_size, hidden_size, num_layers)

    h_ref, c_ref = _reference_forward(x, params)

    # Strict check of the kernel math with f32 matmuls / f32 gate math.
    h32, c32 = encoder_forward(x, params, matmul_dtype=jnp.float32)
    h32 = jax.block_until_ready(h32)
    c32 = jax.block_until_ready(c32)
    np.testing.assert_allclose(np.asarray(h32), np.asarray(h_ref),
                               rtol=5e-3, atol=5e-3)
    np.testing.assert_allclose(np.asarray(c32), np.asarray(c_ref),
                               rtol=5e-3, atol=5e-3)

    # Default perf path: bf16 matmul operands (+ bf16 EUP gates on v6e/v7x),
    # f32 accumulation and f32 cell/hidden carries.
    hidden, cell = encoder_forward(x, params)
    hidden = jax.block_until_ready(hidden)
    cell = jax.block_until_ready(cell)
    assert hidden.shape == (num_layers, batch, hidden_size)
    assert cell.shape == (num_layers, batch, hidden_size)
    np.testing.assert_allclose(np.asarray(hidden), np.asarray(h_ref),
                               rtol=4e-2, atol=4e-2)
    np.testing.assert_allclose(np.asarray(cell), np.asarray(c_ref),
                               rtol=4e-2, atol=4e-2)

    print("KERNEL_OK")
</pallas_src>

<mosaic_0001>
module attributes {stable_mosaic.version = 11 : i64} {
  func.func @_lstm_chunk_kernel(%arg0: i32, %arg1: i32, %arg2: memref<8x2x16xf32, #tpu.memory_space<vmem>>, %arg3: memref<4x16x32xf32, #tpu.memory_space<vmem>>, %arg4: memref<4x32x32xf32, #tpu.memory_space<vmem>>, %arg5: memref<4x1x32xf32, #tpu.memory_space<vmem>>, %arg6: memref<8x2x32xf32, #tpu.memory_space<vmem>>, %arg7: memref<2x32xf32, #tpu.memory_space<vmem>>, %arg8: memref<2x32xf32, #tpu.memory_space<vmem>>, %arg9: memref<2x32xf32, #tpu.memory_space<vmem>>, %arg10: memref<2x32xf32, #tpu.memory_space<vmem>>) attributes {dimension_semantics = [#tpu.dimension_semantics<parallel>, #tpu.dimension_semantics<arbitrary>], iteration_bounds = array<i64: 1, 1>, scalar_prefetch = 0 : i64, scratch_operands = 2 : i64, tpu.core_type = #tpu.core_type<tc>, window_params = [{transform_indices = @transform_0, window_bounds = array<i64: 8, 2, 16>}, {pipeline_mode = #tpu.pipeline_mode<synchronous>, transform_indices = @transform_1, window_bounds = array<i64: 4, 16, 32>}, {pipeline_mode = #tpu.pipeline_mode<synchronous>, transform_indices = @transform_2, window_bounds = array<i64: 4, 32, 32>}, {pipeline_mode = #tpu.pipeline_mode<synchronous>, transform_indices = @transform_3, window_bounds = array<i64: 4, 1, 32>}, {transform_indices = @transform_4, window_bounds = array<i64: 8, 2, 32>}, {transform_indices = @transform_5, window_bounds = array<i64: 2, 32>}, {transform_indices = @transform_6, window_bounds = array<i64: 2, 32>}]} {
    %c0_i32 = arith.constant 0 : i32
    %0 = arith.cmpi eq, %arg1, %c0_i32 : i32
    %1 = arith.extui %0 : i1 to i32
    %c0_i32_0 = arith.constant 0 : i32
    %2 = arith.cmpi ne, %1, %c0_i32_0 : i32
    scf.if %2 {
      %cst_163 = arith.constant 0.000000e+00 : f32
      %394 = vector.broadcast %cst_163 : f32 to vector<2x32xf32>
      %c0_164 = arith.constant 0 : index
      %c0_165 = arith.constant 0 : index
      %395 = vector.load %arg9[%c0_164, %c0_165] : memref<2x32xf32, #tpu.memory_space<vmem>>, vector<2x32xf32>
      tpu.vector_store %arg9[%c0_164, %c0_165], %394 {strides = array<i32>} : memref<2x32xf32, #tpu.memory_space<vmem>>, vector<2x32xf32>,
      %cst_166 = arith.constant 0.000000e+00 : f32
      %396 = vector.broadcast %cst_166 : f32 to vector<2x32xf32>
      %c0_167 = arith.constant 0 : index
      %c0_168 = arith.constant 0 : index
      %397 = vector.load %arg10[%c0_167, %c0_168] : memref<2x32xf32, #tpu.memory_space<vmem>>, vector<2x32xf32>
      tpu.vector_store %arg10[%c0_167, %c0_168], %396 {strides = array<i32>} : memref<2x32xf32, #tpu.memory_space<vmem>>, vector<2x32xf32>,
    } else {
    }
    %c0 = arith.constant 0 : index
    %c0_1 = arith.constant 0 : index
    %c0_2 = arith.constant 0 : index
    %3 = vector.load %arg3[%c0, %c0_1, %c0_2] : memref<4x16x32xf32, #tpu.memory_space<vmem>>, vector<1x16x32xf32>
    %4 = vector.shape_cast %3 : vector<1x16x32xf32> to vector<16x32xf32>
    %c1 = arith.constant 1 : index
    %c0_3 = arith.constant 0 : index
    %c0_4 = arith.constant 0 : index
    %5 = vector.load %arg3[%c1, %c0_3, %c0_4] : memref<4x16x32xf32, #tpu.memory_space<vmem>>, vector<1x16x32xf32>
    %6 = vector.shape_cast %5 : vector<1x16x32xf32> to vector<16x32xf32>
    %c2 = arith.constant 2 : index
    %c0_5 = arith.constant 0 : index
    %c0_6 = arith.constant 0 : index
    %7 = vector.load %arg3[%c2, %c0_5, %c0_6] : memref<4x16x32xf32, #tpu.memory_space<vmem>>, vector<1x16x32xf32>
    %8 = vector.shape_cast %7 : vector<1x16x32xf32> to vector<16x32xf32>
    %c3 = arith.constant 3 : index
    %c0_7 = arith.constant 0 : index
    %c0_8 = arith.constant 0 : index
    %9 = vector.load %arg3[%c3, %c0_7, %c0_8] : memref<4x16x32xf32, #tpu.memory_space<vmem>>, vector<1x16x32xf32>
    %10 = vector.shape_cast %9 : vector<1x16x32xf32> to vector<16x32xf32>
    %c0_9 = arith.constant 0 : index
    %c0_10 = arith.constant 0 : index
    %c0_11 = arith.constant 0 : index
    %11 = vector.load %arg4[%c0_9, %c0_10, %c0_11] : memref<4x32x32xf32, #tpu.memory_space<vmem>>, vector<1x32x32xf32>
    %12 = vector.shape_cast %11 : vector<1x32x32xf32> to vector<32x32xf32>
    %c1_12 = arith.constant 1 : index
    %c0_13 = arith.constant 0 : index
    %c0_14 = arith.constant 0 : index
    %13 = vector.load %arg4[%c1_12, %c0_13, %c0_14] : memref<4x32x32xf32, #tpu.memory_space<vmem>>, vector<1x32x32xf32>
    %14 = vector.shape_cast %13 : vector<1x32x32xf32> to vector<32x32xf32>
    %c2_15 = arith.constant 2 : index
    %c0_16 = arith.constant 0 : index
    %c0_17 = arith.constant 0 : index
    %15 = vector.load %arg4[%c2_15, %c0_16, %c0_17] : memref<4x32x32xf32, #tpu.memory_space<vmem>>, vector<1x32x32xf32>
    %16 = vector.shape_cast %15 : vector<1x32x32xf32> to vector<32x32xf32>
    %c3_18 = arith.constant 3 : index
    %c0_19 = arith.constant 0 : index
    %c0_20 = arith.constant 0 : index
    %17 = vector.load %arg4[%c3_18, %c0_19, %c0_20] : memref<4x32x32xf32, #tpu.memory_space<vmem>>, vector<1x32x32xf32>
    %18 = vector.shape_cast %17 : vector<1x32x32xf32> to vector<32x32xf32>
    %c0_21 = arith.constant 0 : index
    %c0_22 = arith.constant 0 : index
    %c0_23 = arith.constant 0 : index
    %19 = vector.load %arg5[%c0_21, %c0_22, %c0_23] : memref<4x1x32xf32, #tpu.memory_space<vmem>>, vector<1x1x32xf32>
    %20 = vector.shape_cast %19 : vector<1x1x32xf32> to vector<1x32xf32>
    %21 = vector.shape_cast %20 : vector<1x32xf32> to vector<1x32xf32>
    %22 = vector.broadcast %21 : vector<1x32xf32> to vector<2x32xf32>
    %c1_24 = arith.constant 1 : index
    %c0_25 = arith.constant 0 : index
    %c0_26 = arith.constant 0 : index
    %23 = vector.load %arg5[%c1_24, %c0_25, %c0_26] : memref<4x1x32xf32, #tpu.memory_space<vmem>>, vector<1x1x32xf32>
    %24 = vector.shape_cast %23 : vector<1x1x32xf32> to vector<1x32xf32>
    %25 = vector.shape_cast %24 : vector<1x32xf32> to vector<1x32xf32>
    %26 = vector.broadcast %25 : vector<1x32xf32> to vector<2x32xf32>
    %c2_27 = arith.constant 2 : index
    %c0_28 = arith.constant 0 : index
    %c0_29 = arith.constant 0 : index
    %27 = vector.load %arg5[%c2_27, %c0_28, %c0_29] : memref<4x1x32xf32, #tpu.memory_space<vmem>>, vector<1x1x32xf32>
    %28 = vector.shape_cast %27 : vector<1x1x32xf32> to vector<1x32xf32>
    %29 = vector.shape_cast %28 : vector<1x32xf32> to vector<1x32xf32>
    %30 = vector.broadcast %29 : vector<1x32xf32> to vector<2x32xf32>
    %c3_30 = arith.constant 3 : index
    %c0_31 = arith.constant 0 : index
    %c0_32 = arith.constant 0 : index
    %31 = vector.load %arg5[%c3_30, %c0_31, %c0_32] : memref<4x1x32xf32, #tpu.memory_space<vmem>>, vector<1x1x32xf32>
    %32 = vector.shape_cast %31 : vector<1x1x32xf32> to vector<1x32xf32>
    %33 = vector.shape_cast %32 : vector<1x32xf32> to vector<1x32xf32>
    %34 = vector.broadcast %33 : vector<1x32xf32> to vector<2x32xf32>
    %c0_33 = arith.constant 0 : index
    %c0_34 = arith.constant 0 : index
    %35 = vector.load %arg9[%c0_33, %c0_34] : memref<2x32xf32, #tpu.memory_space<vmem>>, vector<2x32xf32>
    %c0_35 = arith.constant 0 : index
    %c0_36 = arith.constant 0 : index
    %36 = vector.load %arg10[%c0_35, %c0_36] : memref<2x32xf32, #tpu.memory_space<vmem>>, vector<2x32xf32>
    %c0_i32_37 = arith.constant 0 : i32
    %37 = arith.index_cast %c0_i32_37 : i32 to index
    %c0_38 = arith.constant 0 : index
    %c0_39 = arith.constant 0 : index
    %38 = vector.load %arg2[%37, %c0_38, %c0_39] : memref<8x2x16xf32, #tpu.memory_space<vmem>>, vector<1x2x16xf32>
    %39 = vector.shape_cast %38 : vector<1x2x16xf32> to vector<2x16xf32>
    %cst = arith.constant dense<0.000000e+00> : vector<2x32xf32>
    %40 = tpu.matmul %39, %4, %cst {dimension_numbers = #tpu.dot_dimension_numbers<[1], [0], [0], [1], [0, 0, 1, 1], [], []>} : vector<2x16xf32>, vector<16x32xf32>, vector<2x32xf32> -> vector<2x32xf32>
    %cst_40 = arith.constant dense<0.000000e+00> : vector<2x32xf32>
    %41 = tpu.matmul %35, %12, %cst_40 {dimension_numbers = #tpu.dot_dimension_numbers<[1], [0], [0], [1], [0, 0, 1, 1], [], []>} : vector<2x32xf32>, vector<32x32xf32>, vector<2x32xf32> -> vector<2x32xf32>
    %42 = arith.addf %40, %41 : vector<2x32xf32>
    %43 = arith.addf %42, %22 : vector<2x32xf32>
    %44 = arith.negf %43 : vector<2x32xf32>
    %45 = math.exp %44 : vector<2x32xf32>
    %cst_41 = arith.constant 1.000000e+00 : f32
    %46 = vector.broadcast %cst_41 : f32 to vector<2x32xf32>
    %47 = arith.addf %46, %45 : vector<2x32xf32>
    %48 = arith.divf %46, %47 : vector<2x32xf32>
    %cst_42 = arith.constant dense<0.000000e+00> : vector<2x32xf32>
    %49 = tpu.matmul %39, %6, %cst_42 {dimension_numbers = #tpu.dot_dimension_numbers<[1], [0], [0], [1], [0, 0, 1, 1], [], []>} : vector<2x16xf32>, vector<16x32xf32>, vector<2x32xf32> -> vector<2x32xf32>
    %cst_43 = arith.constant dense<0.000000e+00> : vector<2x32xf32>
    %50 = tpu.matmul %35, %14, %cst_43 {dimension_numbers = #tpu.dot_dimension_numbers<[1], [0], [0], [1], [0, 0, 1, 1], [], []>} : vector<2x32xf32>, vector<32x32xf32>, vector<2x32xf32> -> vector<2x32xf32>
    %51 = arith.addf %49, %50 : vector<2x32xf32>
    %52 = arith.addf %51, %26 : vector<2x32xf32>
    %53 = arith.negf %52 : vector<2x32xf32>
    %54 = math.exp %53 : vector<2x32xf32>
    %cst_44 = arith.constant 1.000000e+00 : f32
    %55 = vector.broadcast %cst_44 : f32 to vector<2x32xf32>
    %56 = arith.addf %55, %54 : vector<2x32xf32>
    %57 = arith.divf %55, %56 : vector<2x32xf32>
    %cst_45 = arith.constant dense<0.000000e+00> : vector<2x32xf32>
    %58 = tpu.matmul %39, %8, %cst_45 {dimension_numbers = #tpu.dot_dimension_numbers<[1], [0], [0], [1], [0, 0, 1, 1], [], []>} : vector<2x16xf32>, vector<16x32xf32>, vector<2x32xf32> -> vector<2x32xf32>
    %cst_46 = arith.constant dense<0.000000e+00> : vector<2x32xf32>
    %59 = tpu.matmul %35, %16, %cst_46 {dimension_numbers = #tpu.dot_dimension_numbers<[1], [0], [0], [1], [0, 0, 1, 1], [], []>} : vector<2x32xf32>, vector<32x32xf32>, vector<2x32xf32> -> vector<2x32xf32>
    %60 = arith.addf %58, %59 : vector<2x32xf32>
    %61 = arith.addf %60, %30 : vector<2x32xf32>
    %62 = math.tanh %61 : vector<2x32xf32>
    %cst_47 = arith.constant dense<0.000000e+00> : vector<2x32xf32>
    %63 = tpu.matmul %39, %10, %cst_47 {dimension_numbers = #tpu.dot_dimension_numbers<[1], [0], [0], [1], [0, 0, 1, 1], [], []>} : vector<2x16xf32>, vector<16x32xf32>, vector<2x32xf32> -> vector<2x32xf32>
    %cst_48 = arith.constant dense<0.000000e+00> : vector<2x32xf32>
    %64 = tpu.matmul %35, %18, %cst_48 {dimension_numbers = #tpu.dot_dimension_numbers<[1], [0], [0], [1], [0, 0, 1, 1], [], []>} : vector<2x32xf32>, vector<32x32xf32>, vector<2x32xf32> -> vector<2x32xf32>
    %65 = arith.addf %63, %64 : vector<2x32xf32>
    %66 = arith.addf %65, %34 : vector<2x32xf32>
    %67 = arith.negf %66 : vector<2x32xf32>
    %68 = math.exp %67 : vector<2x32xf32>
    %cst_49 = arith.constant 1.000000e+00 : f32
    %69 = vector.broadcast %cst_49 : f32 to vector<2x32xf32>
    %70 = arith.addf %69, %68 : vector<2x32xf32>
    %71 = arith.divf %69, %70 : vector<2x32xf32>
    %72 = arith.mulf %57, %36 : vector<2x32xf32>
    %73 = arith.mulf %48, %62 : vector<2x32xf32>
    %74 = arith.addf %72, %73 : vector<2x32xf32>
    %75 = math.tanh %74 : vector<2x32xf32>
    %76 = arith.mulf %71, %75 : vector<2x32xf32>
    %77 = arith.index_cast %c0_i32_37 : i32 to index
    %c0_50 = arith.constant 0 : index
    %c0_51 = arith.constant 0 : index
    %78 = vector.load %arg6[%77, %c0_50, %c0_51] : memref<8x2x32xf32, #tpu.memory_space<vmem>>, vector<1x2x32xf32>
    %79 = vector.shape_cast %78 : vector<1x2x32xf32> to vector<2x32xf32>
    %80 = vector.shape_cast %76 : vector<2x32xf32> to vector<1x2x32xf32>
    tpu.vector_store %arg6[%77, %c0_50, %c0_51], %80 {strides = array<i32>} : memref<8x2x32xf32, #tpu.memory_space<vmem>>, vector<1x2x32xf32>,
    %c1_i32 = arith.constant 1 : i32
    %81 = arith.index_cast %c1_i32 : i32 to index
    %c0_52 = arith.constant 0 : index
    %c0_53 = arith.constant 0 : index
    %82 = vector.load %arg2[%81, %c0_52, %c0_53] : memref<8x2x16xf32, #tpu.memory_space<vmem>>, vector<1x2x16xf32>
    %83 = vector.shape_cast %82 : vector<1x2x16xf32> to vector<2x16xf32>
    %cst_54 = arith.constant dense<0.000000e+00> : vector<2x32xf32>
    %84 = tpu.matmul %83, %4, %cst_54 {dimension_numbers = #tpu.dot_dimension_numbers<[1], [0], [0], [1], [0, 0, 1, 1], [], []>} : vector<2x16xf32>, vector<16x32xf32>, vector<2x32xf32> -> vector<2x32xf32>
    %cst_55 = arith.constant dense<0.000000e+00> : vector<2x32xf32>
    %85 = tpu.matmul %76, %12, %cst_55 {dimension_numbers = #tpu.dot_dimension_numbers<[1], [0], [0], [1], [0, 0, 1, 1], [], []>} : vector<2x32xf32>, vector<32x32xf32>, vector<2x32xf32> -> vector<2x32xf32>
    %86 = arith.addf %84, %85 : vector<2x32xf32>
    %87 = arith.addf %86, %22 : vector<2x32xf32>
    %88 = arith.negf %87 : vector<2x32xf32>
    %89 = math.exp %88 : vector<2x32xf32>
    %cst_56 = arith.constant 1.000000e+00 : f32
    %90 = vector.broadcast %cst_56 : f32 to vector<2x32xf32>
    %91 = arith.addf %90, %89 : vector<2x32xf32>
    %92 = arith.divf %90, %91 : vector<2x32xf32>
    %cst_57 = arith.constant dense<0.000000e+00> : vector<2x32xf32>
    %93 = tpu.matmul %83, %6, %cst_57 {dimension_numbers = #tpu.dot_dimension_numbers<[1], [0], [0], [1], [0, 0, 1, 1], [], []>} : vector<2x16xf32>, vector<16x32xf32>, vector<2x32xf32> -> vector<2x32xf32>
    %cst_58 = arith.constant dense<0.000000e+00> : vector<2x32xf32>
    %94 = tpu.matmul %76, %14, %cst_58 {dimension_numbers = #tpu.dot_dimension_numbers<[1], [0], [0], [1], [0, 0, 1, 1], [], []>} : vector<2x32xf32>, vector<32x32xf32>, vector<2x32xf32> -> vector<2x32xf32>
    %95 = arith.addf %93, %94 : vector<2x32xf32>
    %96 = arith.addf %95, %26 : vector<2x32xf32>
    %97 = arith.negf %96 : vector<2x32xf32>
    %98 = math.exp %97 : vector<2x32xf32>
    %cst_59 = arith.constant 1.000000e+00 : f32
    %99 = vector.broadcast %cst_59 : f32 to vector<2x32xf32>
    %100 = arith.addf %99, %98 : vector<2x32xf32>
    %101 = arith.divf %99, %100 : vector<2x32xf32>
    %cst_60 = arith.constant dense<0.000000e+00> : vector<2x32xf32>
    %102 = tpu.matmul %83, %8, %cst_60 {dimension_numbers = #tpu.dot_dimension_numbers<[1], [0], [0], [1], [0, 0, 1, 1], [], []>} : vector<2x16xf32>, vector<16x32xf32>, vector<2x32xf32> -> vector<2x32xf32>
    %cst_61 = arith.constant dense<0.000000e+00> : vector<2x32xf32>
    %103 = tpu.matmul %76, %16, %cst_61 {dimension_numbers = #tpu.dot_dimension_numbers<[1], [0], [0], [1], [0, 0, 1, 1], [], []>} : vector<2x32xf32>, vector<32x32xf32>, vector<2x32xf32> -> vector<2x32xf32>
    %104 = arith.addf %102, %103 : vector<2x32xf32>
    %105 = arith.addf %104, %30 : vector<2x32xf32>
    %106 = math.tanh %105 : vector<2x32xf32>
    %cst_62 = arith.constant dense<0.000000e+00> : vector<2x32xf32>
    %107 = tpu.matmul %83, %10, %cst_62 {dimension_numbers = #tpu.dot_dimension_numbers<[1], [0], [0], [1], [0, 0, 1, 1], [], []>} : vector<2x16xf32>, vector<16x32xf32>, vector<2x32xf32> -> vector<2x32xf32>
    %cst_63 = arith.constant dense<0.000000e+00> : vector<2x32xf32>
    %108 = tpu.matmul %76, %18, %cst_63 {dimension_numbers = #tpu.dot_dimension_numbers<[1], [0], [0], [1], [0, 0, 1, 1], [], []>} : vector<2x32xf32>, vector<32x32xf32>, vector<2x32xf32> -> vector<2x32xf32>
    %109 = arith.addf %107, %108 : vector<2x32xf32>
    %110 = arith.addf %109, %34 : vector<2x32xf32>
    %111 = arith.negf %110 : vector<2x32xf32>
    %112 = math.exp %111 : vector<2x32xf32>
    %cst_64 = arith.constant 1.000000e+00 : f32
    %113 = vector.broadcast %cst_64 : f32 to vector<2x32xf32>
    %114 = arith.addf %113, %112 : vector<2x32xf32>
    %115 = arith.divf %113, %114 : vector<2x32xf32>
    %116 = arith.mulf %101, %74 : vector<2x32xf32>
    %117 = arith.mulf %92, %106 : vector<2x32xf32>
    %118 = arith.addf %116, %117 : vector<2x32xf32>
    %119 = math.tanh %118 : vector<2x32xf32>
    %120 = arith.mulf %115, %119 : vector<2x32xf32>
    %121 = arith.index_cast %c1_i32 : i32 to index
    %c0_65 = arith.constant 0 : index
    %c0_66 = arith.constant 0 : index
    %122 = vector.load %arg6[%121, %c0_65, %c0_66] : memref<8x2x32xf32, #tpu.memory_space<vmem>>, vector<1x2x32xf32>
    %123 = vector.shape_cast %122 : vector<1x2x32xf32> to vector<2x32xf32>
    %124 = vector.shape_cast %120 : vector<2x32xf32> to vector<1x2x32xf32>
    tpu.vector_store %arg6[%121, %c0_65, %c0_66], %124 {strides = array<i32>} : memref<8x2x32xf32, #tpu.memory_space<vmem>>, vector<1x2x32xf32>,
    %c2_i32 = arith.constant 2 : i32
    %125 = arith.index_cast %c2_i32 : i32 to index
    %c0_67 = arith.constant 0 : index
    %c0_68 = arith.constant 0 : index
    %126 = vector.load %arg2[%125, %c0_67, %c0_68] : memref<8x2x16xf32, #tpu.memory_space<vmem>>, vector<1x2x16xf32>
    %127 = vector.shape_cast %126 : vector<1x2x16xf32> to vector<2x16xf32>
    %cst_69 = arith.constant dense<0.000000e+00> : vector<2x32xf32>
    %128 = tpu.matmul %127, %4, %cst_69 {dimension_numbers = #tpu.dot_dimension_numbers<[1], [0], [0], [1], [0, 0, 1, 1], [], []>} : vector<2x16xf32>, vector<16x32xf32>, vector<2x32xf32> -> vector<2x32xf32>
    %cst_70 = arith.constant dense<0.000000e+00> : vector<2x32xf32>
    %129 = tpu.matmul %120, %12, %cst_70 {dimension_numbers = #tpu.dot_dimension_numbers<[1], [0], [0], [1], [0, 0, 1, 1], [], []>} : vector<2x32xf32>, vector<32x32xf32>, vector<2x32xf32> -> vector<2x32xf32>
    %130 = arith.addf %128, %129 : vector<2x32xf32>
    %131 = arith.addf %130, %22 : vector<2x32xf32>
    %132 = arith.negf %131 : vector<2x32xf32>
    %133 = math.exp %132 : vector<2x32xf32>
    %cst_71 = arith.constant 1.000000e+00 : f32
    %134 = vector.broadcast %cst_71 : f32 to vector<2x32xf32>
    %135 = arith.addf %134, %133 : vector<2x32xf32>
    %136 = arith.divf %134, %135 : vector<2x32xf32>
    %cst_72 = arith.constant dense<0.000000e+00> : vector<2x32xf32>
    %137 = tpu.matmul %127, %6, %cst_72 {dimension_numbers = #tpu.dot_dimension_numbers<[1], [0], [0], [1], [0, 0, 1, 1], [], []>} : vector<2x16xf32>, vector<16x32xf32>, vector<2x32xf32> -> vector<2x32xf32>
    %cst_73 = arith.constant dense<0.000000e+00> : vector<2x32xf32>
    %138 = tpu.matmul %120, %14, %cst_73 {dimension_numbers = #tpu.dot_dimension_numbers<[1], [0], [0], [1], [0, 0, 1, 1], [], []>} : vector<2x32xf32>, vector<32x32xf32>, vector<2x32xf32> -> vector<2x32xf32>
    %139 = arith.addf %137, %138 : vector<2x32xf32>
    %140 = arith.addf %139, %26 : vector<2x32xf32>
    %141 = arith.negf %140 : vector<2x32xf32>
    %142 = math.exp %141 : vector<2x32xf32>
    %cst_74 = arith.constant 1.000000e+00 : f32
    %143 = vector.broadcast %cst_74 : f32 to vector<2x32xf32>
    %144 = arith.addf %143, %142 : vector<2x32xf32>
    %145 = arith.divf %143, %144 : vector<2x32xf32>
    %cst_75 = arith.constant dense<0.000000e+00> : vector<2x32xf32>
    %146 = tpu.matmul %127, %8, %cst_75 {dimension_numbers = #tpu.dot_dimension_numbers<[1], [0], [0], [1], [0, 0, 1, 1], [], []>} : vector<2x16xf32>, vector<16x32xf32>, vector<2x32xf32> -> vector<2x32xf32>
    %cst_76 = arith.constant dense<0.000000e+00> : vector<2x32xf32>
    %147 = tpu.matmul %120, %16, %cst_76 {dimension_numbers = #tpu.dot_dimension_numbers<[1], [0], [0], [1], [0, 0, 1, 1], [], []>} : vector<2x32xf32>, vector<32x32xf32>, vector<2x32xf32> -> vector<2x32xf32>
    %148 = arith.addf %146, %147 : vector<2x32xf32>
    %149 = arith.addf %148, %30 : vector<2x32xf32>
    %150 = math.tanh %149 : vector<2x32xf32>
    %cst_77 = arith.constant dense<0.000000e+00> : vector<2x32xf32>
    %151 = tpu.matmul %127, %10, %cst_77 {dimension_numbers = #tpu.dot_dimension_numbers<[1], [0], [0], [1], [0, 0, 1, 1], [], []>} : vector<2x16xf32>, vector<16x32xf32>, vector<2x32xf32> -> vector<2x32xf32>
    %cst_78 = arith.constant dense<0.000000e+00> : vector<2x32xf32>
    %152 = tpu.matmul %120, %18, %cst_78 {dimension_numbers = #tpu.dot_dimension_numbers<[1], [0], [0], [1], [0, 0, 1, 1], [], []>} : vector<2x32xf32>, vector<32x32xf32>, vector<2x32xf32> -> vector<2x32xf32>
    %153 = arith.addf %151, %152 : vector<2x32xf32>
    %154 = arith.addf %153, %34 : vector<2x32xf32>
    %155 = arith.negf %154 : vector<2x32xf32>
    %156 = math.exp %155 : vector<2x32xf32>
    %cst_79 = arith.constant 1.000000e+00 : f32
    %157 = vector.broadcast %cst_79 : f32 to vector<2x32xf32>
    %158 = arith.addf %157, %156 : vector<2x32xf32>
    %159 = arith.divf %157, %158 : vector<2x32xf32>
    %160 = arith.mulf %145, %118 : vector<2x32xf32>
    %161 = arith.mulf %136, %150 : vector<2x32xf32>
    %162 = arith.addf %160, %161 : vector<2x32xf32>
    %163 = math.tanh %162 : vector<2x32xf32>
    %164 = arith.mulf %159, %163 : vector<2x32xf32>
    %165 = arith.index_cast %c2_i32 : i32 to index
    %c0_80 = arith.constant 0 : index
    %c0_81 = arith.constant 0 : index
    %166 = vector.load %arg6[%165, %c0_80, %c0_81] : memref<8x2x32xf32, #tpu.memory_space<vmem>>, vector<1x2x32xf32>
    %167 = vector.shape_cast %166 : vector<1x2x32xf32> to vector<2x32xf32>
    %168 = vector.shape_cast %164 : vector<2x32xf32> to vector<1x2x32xf32>
    tpu.vector_store %arg6[%165, %c0_80, %c0_81], %168 {strides = array<i32>} : memref<8x2x32xf32, #tpu.memory_space<vmem>>, vector<1x2x32xf32>,
    %c3_i32 = arith.constant 3 : i32
    %169 = arith.index_cast %c3_i32 : i32 to index
    %c0_82 = arith.constant 0 : index
    %c0_83 = arith.constant 0 : index
    %170 = vector.load %arg2[%169, %c0_82, %c0_83] : memref<8x2x16xf32, #tpu.memory_space<vmem>>, vector<1x2x16xf32>
    %171 = vector.shape_cast %170 : vector<1x2x16xf32> to vector<2x16xf32>
    %cst_84 = arith.constant dense<0.000000e+00> : vector<2x32xf32>
    %172 = tpu.matmul %171, %4, %cst_84 {dimension_numbers = #tpu.dot_dimension_numbers<[1], [0], [0], [1], [0, 0, 1, 1], [], []>} : vector<2x16xf32>, vector<16x32xf32>, vector<2x32xf32> -> vector<2x32xf32>
    %cst_85 = arith.constant dense<0.000000e+00> : vector<2x32xf32>
    %173 = tpu.matmul %164, %12, %cst_85 {dimension_numbers = #tpu.dot_dimension_numbers<[1], [0], [0], [1], [0, 0, 1, 1], [], []>} : vector<2x32xf32>, vector<32x32xf32>, vector<2x32xf32> -> vector<2x32xf32>
    %174 = arith.addf %172, %173 : vector<2x32xf32>
    %175 = arith.addf %174, %22 : vector<2x32xf32>
    %176 = arith.negf %175 : vector<2x32xf32>
    %177 = math.exp %176 : vector<2x32xf32>
    %cst_86 = arith.constant 1.000000e+00 : f32
    %178 = vector.broadcast %cst_86 : f32 to vector<2x32xf32>
    %179 = arith.addf %178, %177 : vector<2x32xf32>
    %180 = arith.divf %178, %179 : vector<2x32xf32>
    %cst_87 = arith.constant dense<0.000000e+00> : vector<2x32xf32>
    %181 = tpu.matmul %171, %6, %cst_87 {dimension_numbers = #tpu.dot_dimension_numbers<[1], [0], [0], [1], [0, 0, 1, 1], [], []>} : vector<2x16xf32>, vector<16x32xf32>, vector<2x32xf32> -> vector<2x32xf32>
    %cst_88 = arith.constant dense<0.000000e+00> : vector<2x32xf32>
    %182 = tpu.matmul %164, %14, %cst_88 {dimension_numbers = #tpu.dot_dimension_numbers<[1], [0], [0], [1], [0, 0, 1, 1], [], []>} : vector<2x32xf32>, vector<32x32xf32>, vector<2x32xf32> -> vector<2x32xf32>
    %183 = arith.addf %181, %182 : vector<2x32xf32>
    %184 = arith.addf %183, %26 : vector<2x32xf32>
    %185 = arith.negf %184 : vector<2x32xf32>
    %186 = math.exp %185 : vector<2x32xf32>
    %cst_89 = arith.constant 1.000000e+00 : f32
    %187 = vector.broadcast %cst_89 : f32 to vector<2x32xf32>
    %188 = arith.addf %187, %186 : vector<2x32xf32>
    %189 = arith.divf %187, %188 : vector<2x32xf32>
    %cst_90 = arith.constant dense<0.000000e+00> : vector<2x32xf32>
    %190 = tpu.matmul %171, %8, %cst_90 {dimension_numbers = #tpu.dot_dimension_numbers<[1], [0], [0], [1], [0, 0, 1, 1], [], []>} : vector<2x16xf32>, vector<16x32xf32>, vector<2x32xf32> -> vector<2x32xf32>
    %cst_91 = arith.constant dense<0.000000e+00> : vector<2x32xf32>
    %191 = tpu.matmul %164, %16, %cst_91 {dimension_numbers = #tpu.dot_dimension_numbers<[1], [0], [0], [1], [0, 0, 1, 1], [], []>} : vector<2x32xf32>, vector<32x32xf32>, vector<2x32xf32> -> vector<2x32xf32>
    %192 = arith.addf %190, %191 : vector<2x32xf32>
    %193 = arith.addf %192, %30 : vector<2x32xf32>
    %194 = math.tanh %193 : vector<2x32xf32>
    %cst_92 = arith.constant dense<0.000000e+00> : vector<2x32xf32>
    %195 = tpu.matmul %171, %10, %cst_92 {dimension_numbers = #tpu.dot_dimension_numbers<[1], [0], [0], [1], [0, 0, 1, 1], [], []>} : vector<2x16xf32>, vector<16x32xf32>, vector<2x32xf32> -> vector<2x32xf32>
    %cst_93 = arith.constant dense<0.000000e+00> : vector<2x32xf32>
    %196 = tpu.matmul %164, %18, %cst_93 {dimension_numbers = #tpu.dot_dimension_numbers<[1], [0], [0], [1], [0, 0, 1, 1], [], []>} : vector<2x32xf32>, vector<32x32xf32>, vector<2x32xf32> -> vector<2x32xf32>
    %197 = arith.addf %195, %196 : vector<2x32xf32>
    %198 = arith.addf %197, %34 : vector<2x32xf32>
    %199 = arith.negf %198 : vector<2x32xf32>
    %200 = math.exp %199 : vector<2x32xf32>
    %cst_94 = arith.constant 1.000000e+00 : f32
    %201 = vector.broadcast %cst_94 : f32 to vector<2x32xf32>
    %202 = arith.addf %201, %200 : vector<2x32xf32>
    %203 = arith.divf %201, %202 : vector<2x32xf32>
    %204 = arith.mulf %189, %162 : vector<2x32xf32>
    %205 = arith.mulf %180, %194 : vector<2x32xf32>
    %206 = arith.addf %204, %205 : vector<2x32xf32>
    %207 = math.tanh %206 : vector<2x32xf32>
    %208 = arith.mulf %203, %207 : vector<2x32xf32>
    %209 = arith.index_cast %c3_i32 : i32 to index
    %c0_95 = arith.constant 0 : index
    %c0_96 = arith.constant 0 : index
    %210 = vector.load %arg6[%209, %c0_95, %c0_96] : memref<8x2x32xf32, #tpu.memory_space<vmem>>, vector<1x2x32xf32>
    %211 = vector.shape_cast %210 : vector<1x2x32xf32> to vector<2x32xf32>
    %212 = vector.shape_cast %208 : vector<2x32xf32> to vector<1x2x32xf32>
    tpu.vector_store %arg6[%209, %c0_95, %c0_96], %212 {strides = array<i32>} : memref<8x2x32xf32, #tpu.memory_space<vmem>>, vector<1x2x32xf32>,
    %c4_i32 = arith.constant 4 : i32
    %213 = arith.index_cast %c4_i32 : i32 to index
    %c0_97 = arith.constant 0 : index
    %c0_98 = arith.constant 0 : index
    %214 = vector.load %arg2[%213, %c0_97, %c0_98] : memref<8x2x16xf32, #tpu.memory_space<vmem>>, vector<1x2x16xf32>
    %215 = vector.shape_cast %214 : vector<1x2x16xf32> to vector<2x16xf32>
    %cst_99 = arith.constant dense<0.000000e+00> : vector<2x32xf32>
    %216 = tpu.matmul %215, %4, %cst_99 {dimension_numbers = #tpu.dot_dimension_numbers<[1], [0], [0], [1], [0, 0, 1, 1], [], []>} : vector<2x16xf32>, vector<16x32xf32>, vector<2x32xf32> -> vector<2x32xf32>
    %cst_100 = arith.constant dense<0.000000e+00> : vector<2x32xf32>
    %217 = tpu.matmul %208, %12, %cst_100 {dimension_numbers = #tpu.dot_dimension_numbers<[1], [0], [0], [1], [0, 0, 1, 1], [], []>} : vector<2x32xf32>, vector<32x32xf32>, vector<2x32xf32> -> vector<2x32xf32>
    %218 = arith.addf %216, %217 : vector<2x32xf32>
    %219 = arith.addf %218, %22 : vector<2x32xf32>
    %220 = arith.negf %219 : vector<2x32xf32>
    %221 = math.exp %220 : vector<2x32xf32>
    %cst_101 = arith.constant 1.000000e+00 : f32
    %222 = vector.broadcast %cst_101 : f32 to vector<2x32xf32>
    %223 = arith.addf %222, %221 : vector<2x32xf32>
    %224 = arith.divf %222, %223 : vector<2x32xf32>
    %cst_102 = arith.constant dense<0.000000e+00> : vector<2x32xf32>
    %225 = tpu.matmul %215, %6, %cst_102 {dimension_numbers = #tpu.dot_dimension_numbers<[1], [0], [0], [1], [0, 0, 1, 1], [], []>} : vector<2x16xf32>, vector<16x32xf32>, vector<2x32xf32> -> vector<2x32xf32>
    %cst_103 = arith.constant dense<0.000000e+00> : vector<2x32xf32>
    %226 = tpu.matmul %208, %14, %cst_103 {dimension_numbers = #tpu.dot_dimension_numbers<[1], [0], [0], [1], [0, 0, 1, 1], [], []>} : vector<2x32xf32>, vector<32x32xf32>, vector<2x32xf32> -> vector<2x32xf32>
    %227 = arith.addf %225, %226 : vector<2x32xf32>
    %228 = arith.addf %227, %26 : vector<2x32xf32>
    %229 = arith.negf %228 : vector<2x32xf32>
    %230 = math.exp %229 : vector<2x32xf32>
    %cst_104 = arith.constant 1.000000e+00 : f32
    %231 = vector.broadcast %cst_104 : f32 to vector<2x32xf32>
    %232 = arith.addf %231, %230 : vector<2x32xf32>
    %233 = arith.divf %231, %232 : vector<2x32xf32>
    %cst_105 = arith.constant dense<0.000000e+00> : vector<2x32xf32>
    %234 = tpu.matmul %215, %8, %cst_105 {dimension_numbers = #tpu.dot_dimension_numbers<[1], [0], [0], [1], [0, 0, 1, 1], [], []>} : vector<2x16xf32>, vector<16x32xf32>, vector<2x32xf32> -> vector<2x32xf32>
    %cst_106 = arith.constant dense<0.000000e+00> : vector<2x32xf32>
    %235 = tpu.matmul %208, %16, %cst_106 {dimension_numbers = #tpu.dot_dimension_numbers<[1], [0], [0], [1], [0, 0, 1, 1], [], []>} : vector<2x32xf32>, vector<32x32xf32>, vector<2x32xf32> -> vector<2x32xf32>
    %236 = arith.addf %234, %235 : vector<2x32xf32>
    %237 = arith.addf %236, %30 : vector<2x32xf32>
    %238 = math.tanh %237 : vector<2x32xf32>
    %cst_107 = arith.constant dense<0.000000e+00> : vector<2x32xf32>
    %239 = tpu.matmul %215, %10, %cst_107 {dimension_numbers = #tpu.dot_dimension_numbers<[1], [0], [0], [1], [0, 0, 1, 1], [], []>} : vector<2x16xf32>, vector<16x32xf32>, vector<2x32xf32> -> vector<2x32xf32>
    %cst_108 = arith.constant dense<0.000000e+00> : vector<2x32xf32>
    %240 = tpu.matmul %208, %18, %cst_108 {dimension_numbers = #tpu.dot_dimension_numbers<[1], [0], [0], [1], [0, 0, 1, 1], [], []>} : vector<2x32xf32>, vector<32x32xf32>, vector<2x32xf32> -> vector<2x32xf32>
    %241 = arith.addf %239, %240 : vector<2x32xf32>
    %242 = arith.addf %241, %34 : vector<2x32xf32>
    %243 = arith.negf %242 : vector<2x32xf32>
    %244 = math.exp %243 : vector<2x32xf32>
    %cst_109 = arith.constant 1.000000e+00 : f32
    %245 = vector.broadcast %cst_109 : f32 to vector<2x32xf32>
    %246 = arith.addf %245, %244 : vector<2x32xf32>
    %247 = arith.divf %245, %246 : vector<2x32xf32>
    %248 = arith.mulf %233, %206 : vector<2x32xf32>
    %249 = arith.mulf %224, %238 : vector<2x32xf32>
    %250 = arith.addf %248, %249 : vector<2x32xf32>
    %251 = math.tanh %250 : vector<2x32xf32>
    %252 = arith.mulf %247, %251 : vector<2x32xf32>
    %253 = arith.index_cast %c4_i32 : i32 to index
    %c0_110 = arith.constant 0 : index
    %c0_111 = arith.constant 0 : index
    %254 = vector.load %arg6[%253, %c0_110, %c0_111] : memref<8x2x32xf32, #tpu.memory_space<vmem>>, vector<1x2x32xf32>
    %255 = vector.shape_cast %254 : vector<1x2x32xf32> to vector<2x32xf32>
    %256 = vector.shape_cast %252 : vector<2x32xf32> to vector<1x2x32xf32>
    tpu.vector_store %arg6[%253, %c0_110, %c0_111], %256 {strides = array<i32>} : memref<8x2x32xf32, #tpu.memory_space<vmem>>, vector<1x2x32xf32>,
    %c5_i32 = arith.constant 5 : i32
    %257 = arith.index_cast %c5_i32 : i32 to index
    %c0_112 = arith.constant 0 : index
    %c0_113 = arith.constant 0 : index
    %258 = vector.load %arg2[%257, %c0_112, %c0_113] : memref<8x2x16xf32, #tpu.memory_space<vmem>>, vector<1x2x16xf32>
    %259 = vector.shape_cast %258 : vector<1x2x16xf32> to vector<2x16xf32>
    %cst_114 = arith.constant dense<0.000000e+00> : vector<2x32xf32>
    %260 = tpu.matmul %259, %4, %cst_114 {dimension_numbers = #tpu.dot_dimension_numbers<[1], [0], [0], [1], [0, 0, 1, 1], [], []>} : vector<2x16xf32>, vector<16x32xf32>, vector<2x32xf32> -> vector<2x32xf32>
    %cst_115 = arith.constant dense<0.000000e+00> : vector<2x32xf32>
    %261 = tpu.matmul %252, %12, %cst_115 {dimension_numbers = #tpu.dot_dimension_numbers<[1], [0], [0], [1], [0, 0, 1, 1], [], []>} : vector<2x32xf32>, vector<32x32xf32>, vector<2x32xf32> -> vector<2x32xf32>
    %262 = arith.addf %260, %261 : vector<2x32xf32>
    %263 = arith.addf %262, %22 : vector<2x32xf32>
    %264 = arith.negf %263 : vector<2x32xf32>
    %265 = math.exp %264 : vector<2x32xf32>
    %cst_116 = arith.constant 1.000000e+00 : f32
    %266 = vector.broadcast %cst_116 : f32 to vector<2x32xf32>
    %267 = arith.addf %266, %265 : vector<2x32xf32>
    %268 = arith.divf %266, %267 : vector<2x32xf32>
    %cst_117 = arith.constant dense<0.000000e+00> : vector<2x32xf32>
    %269 = tpu.matmul %259, %6, %cst_117 {dimension_numbers = #tpu.dot_dimension_numbers<[1], [0], [0], [1], [0, 0, 1, 1], [], []>} : vector<2x16xf32>, vector<16x32xf32>, vector<2x32xf32> -> vector<2x32xf32>
    %cst_118 = arith.constant dense<0.000000e+00> : vector<2x32xf32>
    %270 = tpu.matmul %252, %14, %cst_118 {dimension_numbers = #tpu.dot_dimension_numbers<[1], [0], [0], [1], [0, 0, 1, 1], [], []>} : vector<2x32xf32>, vector<32x32xf32>, vector<2x32xf32> -> vector<2x32xf32>
    %271 = arith.addf %269, %270 : vector<2x32xf32>
    %272 = arith.addf %271, %26 : vector<2x32xf32>
    %273 = arith.negf %272 : vector<2x32xf32>
    %274 = math.exp %273 : vector<2x32xf32>
    %cst_119 = arith.constant 1.000000e+00 : f32
    %275 = vector.broadcast %cst_119 : f32 to vector<2x32xf32>
    %276 = arith.addf %275, %274 : vector<2x32xf32>
    %277 = arith.divf %275, %276 : vector<2x32xf32>
    %cst_120 = arith.constant dense<0.000000e+00> : vector<2x32xf32>
    %278 = tpu.matmul %259, %8, %cst_120 {dimension_numbers = #tpu.dot_dimension_numbers<[1], [0], [0], [1], [0, 0, 1, 1], [], []>} : vector<2x16xf32>, vector<16x32xf32>, vector<2x32xf32> -> vector<2x32xf32>
    %cst_121 = arith.constant dense<0.000000e+00> : vector<2x32xf32>
    %279 = tpu.matmul %252, %16, %cst_121 {dimension_numbers = #tpu.dot_dimension_numbers<[1], [0], [0], [1], [0, 0, 1, 1], [], []>} : vector<2x32xf32>, vector<32x32xf32>, vector<2x32xf32> -> vector<2x32xf32>
    %280 = arith.addf %278, %279 : vector<2x32xf32>
    %281 = arith.addf %280, %30 : vector<2x32xf32>
    %282 = math.tanh %281 : vector<2x32xf32>
    %cst_122 = arith.constant dense<0.000000e+00> : vector<2x32xf32>
    %283 = tpu.matmul %259, %10, %cst_122 {dimension_numbers = #tpu.dot_dimension_numbers<[1], [0], [0], [1], [0, 0, 1, 1], [], []>} : vector<2x16xf32>, vector<16x32xf32>, vector<2x32xf32> -> vector<2x32xf32>
    %cst_123 = arith.constant dense<0.000000e+00> : vector<2x32xf32>
    %284 = tpu.matmul %252, %18, %cst_123 {dimension_numbers = #tpu.dot_dimension_numbers<[1], [0], [0], [1], [0, 0, 1, 1], [], []>} : vector<2x32xf32>, vector<32x32xf32>, vector<2x32xf32> -> vector<2x32xf32>
    %285 = arith.addf %283, %284 : vector<2x32xf32>
    %286 = arith.addf %285, %34 : vector<2x32xf32>
    %287 = arith.negf %286 : vector<2x32xf32>
    %288 = math.exp %287 : vector<2x32xf32>
    %cst_124 = arith.constant 1.000000e+00 : f32
    %289 = vector.broadcast %cst_124 : f32 to vector<2x32xf32>
    %290 = arith.addf %289, %288 : vector<2x32xf32>
    %291 = arith.divf %289, %290 : vector<2x32xf32>
    %292 = arith.mulf %277, %250 : vector<2x32xf32>
    %293 = arith.mulf %268, %282 : vector<2x32xf32>
    %294 = arith.addf %292, %293 : vector<2x32xf32>
    %295 = math.tanh %294 : vector<2x32xf32>
    %296 = arith.mulf %291, %295 : vector<2x32xf32>
    %297 = arith.index_cast %c5_i32 : i32 to index
    %c0_125 = arith.constant 0 : index
    %c0_126 = arith.constant 0 : index
    %298 = vector.load %arg6[%297, %c0_125, %c0_126] : memref<8x2x32xf32, #tpu.memory_space<vmem>>, vector<1x2x32xf32>
    %299 = vector.shape_cast %298 : vector<1x2x32xf32> to vector<2x32xf32>
    %300 = vector.shape_cast %296 : vector<2x32xf32> to vector<1x2x32xf32>
    tpu.vector_store %arg6[%297, %c0_125, %c0_126], %300 {strides = array<i32>} : memref<8x2x32xf32, #tpu.memory_space<vmem>>, vector<1x2x32xf32>,
    %c6_i32 = arith.constant 6 : i32
    %301 = arith.index_cast %c6_i32 : i32 to index
    %c0_127 = arith.constant 0 : index
    %c0_128 = arith.constant 0 : index
    %302 = vector.load %arg2[%301, %c0_127, %c0_128] : memref<8x2x16xf32, #tpu.memory_space<vmem>>, vector<1x2x16xf32>
    %303 = vector.shape_cast %302 : vector<1x2x16xf32> to vector<2x16xf32>
    %cst_129 = arith.constant dense<0.000000e+00> : vector<2x32xf32>
    %304 = tpu.matmul %303, %4, %cst_129 {dimension_numbers = #tpu.dot_dimension_numbers<[1], [0], [0], [1], [0, 0, 1, 1], [], []>} : vector<2x16xf32>, vector<16x32xf32>, vector<2x32xf32> -> vector<2x32xf32>
    %cst_130 = arith.constant dense<0.000000e+00> : vector<2x32xf32>
    %305 = tpu.matmul %296, %12, %cst_130 {dimension_numbers = #tpu.dot_dimension_numbers<[1], [0], [0], [1], [0, 0, 1, 1], [], []>} : vector<2x32xf32>, vector<32x32xf32>, vector<2x32xf32> -> vector<2x32xf32>
    %306 = arith.addf %304, %305 : vector<2x32xf32>
    %307 = arith.addf %306, %22 : vector<2x32xf32>
    %308 = arith.negf %307 : vector<2x32xf32>
    %309 = math.exp %308 : vector<2x32xf32>
    %cst_131 = arith.constant 1.000000e+00 : f32
    %310 = vector.broadcast %cst_131 : f32 to vector<2x32xf32>
    %311 = arith.addf %310, %309 : vector<2x32xf32>
    %312 = arith.divf %310, %311 : vector<2x32xf32>
    %cst_132 = arith.constant dense<0.000000e+00> : vector<2x32xf32>
    %313 = tpu.matmul %303, %6, %cst_132 {dimension_numbers = #tpu.dot_dimension_numbers<[1], [0], [0], [1], [0, 0, 1, 1], [], []>} : vector<2x16xf32>, vector<16x32xf32>, vector<2x32xf32> -> vector<2x32xf32>
    %cst_133 = arith.constant dense<0.000000e+00> : vector<2x32xf32>
    %314 = tpu.matmul %296, %14, %cst_133 {dimension_numbers = #tpu.dot_dimension_numbers<[1], [0], [0], [1], [0, 0, 1, 1], [], []>} : vector<2x32xf32>, vector<32x32xf32>, vector<2x32xf32> -> vector<2x32xf32>
    %315 = arith.addf %313, %314 : vector<2x32xf32>
    %316 = arith.addf %315, %26 : vector<2x32xf32>
    %317 = arith.negf %316 : vector<2x32xf32>
    %318 = math.exp %317 : vector<2x32xf32>
    %cst_134 = arith.constant 1.000000e+00 : f32
    %319 = vector.broadcast %cst_134 : f32 to vector<2x32xf32>
    %320 = arith.addf %319, %318 : vector<2x32xf32>
    %321 = arith.divf %319, %320 : vector<2x32xf32>
    %cst_135 = arith.constant dense<0.000000e+00> : vector<2x32xf32>
    %322 = tpu.matmul %303, %8, %cst_135 {dimension_numbers = #tpu.dot_dimension_numbers<[1], [0], [0], [1], [0, 0, 1, 1], [], []>} : vector<2x16xf32>, vector<16x32xf32>, vector<2x32xf32> -> vector<2x32xf32>
    %cst_136 = arith.constant dense<0.000000e+00> : vector<2x32xf32>
    %323 = tpu.matmul %296, %16, %cst_136 {dimension_numbers = #tpu.dot_dimension_numbers<[1], [0], [0], [1], [0, 0, 1, 1], [], []>} : vector<2x32xf32>, vector<32x32xf32>, vector<2x32xf32> -> vector<2x32xf32>
    %324 = arith.addf %322, %323 : vector<2x32xf32>
    %325 = arith.addf %324, %30 : vector<2x32xf32>
    %326 = math.tanh %325 : vector<2x32xf32>
    %cst_137 = arith.constant dense<0.000000e+00> : vector<2x32xf32>
    %327 = tpu.matmul %303, %10, %cst_137 {dimension_numbers = #tpu.dot_dimension_numbers<[1], [0], [0], [1], [0, 0, 1, 1], [], []>} : vector<2x16xf32>, vector<16x32xf32>, vector<2x32xf32> -> vector<2x32xf32>
    %cst_138 = arith.constant dense<0.000000e+00> : vector<2x32xf32>
    %328 = tpu.matmul %296, %18, %cst_138 {dimension_numbers = #tpu.dot_dimension_numbers<[1], [0], [0], [1], [0, 0, 1, 1], [], []>} : vector<2x32xf32>, vector<32x32xf32>, vector<2x32xf32> -> vector<2x32xf32>
    %329 = arith.addf %327, %328 : vector<2x32xf32>
    %330 = arith.addf %329, %34 : vector<2x32xf32>
    %331 = arith.negf %330 : vector<2x32xf32>
    %332 = math.exp %331 : vector<2x32xf32>
    %cst_139 = arith.constant 1.000000e+00 : f32
    %333 = vector.broadcast %cst_139 : f32 to vector<2x32xf32>
    %334 = arith.addf %333, %332 : vector<2x32xf32>
    %335 = arith.divf %333, %334 : vector<2x32xf32>
    %336 = arith.mulf %321, %294 : vector<2x32xf32>
    %337 = arith.mulf %312, %326 : vector<2x32xf32>
    %338 = arith.addf %336, %337 : vector<2x32xf32>
    %339 = math.tanh %338 : vector<2x32xf32>
    %340 = arith.mulf %335, %339 : vector<2x32xf32>
    %341 = arith.index_cast %c6_i32 : i32 to index
    %c0_140 = arith.constant 0 : index
    %c0_141 = arith.constant 0 : index
    %342 = vector.load %arg6[%341, %c0_140, %c0_141] : memref<8x2x32xf32, #tpu.memory_space<vmem>>, vector<1x2x32xf32>
    %343 = vector.shape_cast %342 : vector<1x2x32xf32> to vector<2x32xf32>
    %344 = vector.shape_cast %340 : vector<2x32xf32> to vector<1x2x32xf32>
    tpu.vector_store %arg6[%341, %c0_140, %c0_141], %344 {strides = array<i32>} : memref<8x2x32xf32, #tpu.memory_space<vmem>>, vector<1x2x32xf32>,
    %c7_i32 = arith.constant 7 : i32
    %345 = arith.index_cast %c7_i32 : i32 to index
    %c0_142 = arith.constant 0 : index
    %c0_143 = arith.constant 0 : index
    %346 = vector.load %arg2[%345, %c0_142, %c0_143] : memref<8x2x16xf32, #tpu.memory_space<vmem>>, vector<1x2x16xf32>
    %347 = vector.shape_cast %346 : vector<1x2x16xf32> to vector<2x16xf32>
    %cst_144 = arith.constant dense<0.000000e+00> : vector<2x32xf32>
    %348 = tpu.matmul %347, %4, %cst_144 {dimension_numbers = #tpu.dot_dimension_numbers<[1], [0], [0], [1], [0, 0, 1, 1], [], []>} : vector<2x16xf32>, vector<16x32xf32>, vector<2x32xf32> -> vector<2x32xf32>
    %cst_145 = arith.constant dense<0.000000e+00> : vector<2x32xf32>
    %349 = tpu.matmul %340, %12, %cst_145 {dimension_numbers = #tpu.dot_dimension_numbers<[1], [0], [0], [1], [0, 0, 1, 1], [], []>} : vector<2x32xf32>, vector<32x32xf32>, vector<2x32xf32> -> vector<2x32xf32>
    %350 = arith.addf %348, %349 : vector<2x32xf32>
    %351 = arith.addf %350, %22 : vector<2x32xf32>
    %352 = arith.negf %351 : vector<2x32xf32>
    %353 = math.exp %352 : vector<2x32xf32>
    %cst_146 = arith.constant 1.000000e+00 : f32
    %354 = vector.broadcast %cst_146 : f32 to vector<2x32xf32>
    %355 = arith.addf %354, %353 : vector<2x32xf32>
    %356 = arith.divf %354, %355 : vector<2x32xf32>
    %cst_147 = arith.constant dense<0.000000e+00> : vector<2x32xf32>
    %357 = tpu.matmul %347, %6, %cst_147 {dimension_numbers = #tpu.dot_dimension_numbers<[1], [0], [0], [1], [0, 0, 1, 1], [], []>} : vector<2x16xf32>, vector<16x32xf32>, vector<2x32xf32> -> vector<2x32xf32>
    %cst_148 = arith.constant dense<0.000000e+00> : vector<2x32xf32>
    %358 = tpu.matmul %340, %14, %cst_148 {dimension_numbers = #tpu.dot_dimension_numbers<[1], [0], [0], [1], [0, 0, 1, 1], [], []>} : vector<2x32xf32>, vector<32x32xf32>, vector<2x32xf32> -> vector<2x32xf32>
    %359 = arith.addf %357, %358 : vector<2x32xf32>
    %360 = arith.addf %359, %26 : vector<2x32xf32>
    %361 = arith.negf %360 : vector<2x32xf32>
    %362 = math.exp %361 : vector<2x32xf32>
    %cst_149 = arith.constant 1.000000e+00 : f32
    %363 = vector.broadcast %cst_149 : f32 to vector<2x32xf32>
    %364 = arith.addf %363, %362 : vector<2x32xf32>
    %365 = arith.divf %363, %364 : vector<2x32xf32>
    %cst_150 = arith.constant dense<0.000000e+00> : vector<2x32xf32>
    %366 = tpu.matmul %347, %8, %cst_150 {dimension_numbers = #tpu.dot_dimension_numbers<[1], [0], [0], [1], [0, 0, 1, 1], [], []>} : vector<2x16xf32>, vector<16x32xf32>, vector<2x32xf32> -> vector<2x32xf32>
    %cst_151 = arith.constant dense<0.000000e+00> : vector<2x32xf32>
    %367 = tpu.matmul %340, %16, %cst_151 {dimension_numbers = #tpu.dot_dimension_numbers<[1], [0], [0], [1], [0, 0, 1, 1], [], []>} : vector<2x32xf32>, vector<32x32xf32>, vector<2x32xf32> -> vector<2x32xf32>
    %368 = arith.addf %366, %367 : vector<2x32xf32>
    %369 = arith.addf %368, %30 : vector<2x32xf32>
    %370 = math.tanh %369 : vector<2x32xf32>
    %cst_152 = arith.constant dense<0.000000e+00> : vector<2x32xf32>
    %371 = tpu.matmul %347, %10, %cst_152 {dimension_numbers = #tpu.dot_dimension_numbers<[1], [0], [0], [1], [0, 0, 1, 1], [], []>} : vector<2x16xf32>, vector<16x32xf32>, vector<2x32xf32> -> vector<2x32xf32>
    %cst_153 = arith.constant dense<0.000000e+00> : vector<2x32xf32>
    %372 = tpu.matmul %340, %18, %cst_153 {dimension_numbers = #tpu.dot_dimension_numbers<[1], [0], [0], [1], [0, 0, 1, 1], [], []>} : vector<2x32xf32>, vector<32x32xf32>, vector<2x32xf32> -> vector<2x32xf32>
    %373 = arith.addf %371, %372 : vector<2x32xf32>
    %374 = arith.addf %373, %34 : vector<2x32xf32>
    %375 = arith.negf %374 : vector<2x32xf32>
    %376 = math.exp %375 : vector<2x32xf32>
    %cst_154 = arith.constant 1.000000e+00 : f32
    %377 = vector.broadcast %cst_154 : f32 to vector<2x32xf32>
    %378 = arith.addf %377, %376 : vector<2x32xf32>
    %379 = arith.divf %377, %378 : vector<2x32xf32>
    %380 = arith.mulf %365, %338 : vector<2x32xf32>
    %381 = arith.mulf %356, %370 : vector<2x32xf32>
    %382 = arith.addf %380, %381 : vector<2x32xf32>
    %383 = math.tanh %382 : vector<2x32xf32>
    %384 = arith.mulf %379, %383 : vector<2x32xf32>
    %385 = arith.index_cast %c7_i32 : i32 to index
    %c0_155 = arith.constant 0 : index
    %c0_156 = arith.constant 0 : index
    %386 = vector.load %arg6[%385, %c0_155, %c0_156] : memref<8x2x32xf32, #tpu.memory_space<vmem>>, vector<1x2x32xf32>
    %387 = vector.shape_cast %386 : vector<1x2x32xf32> to vector<2x32xf32>
    %388 = vector.shape_cast %384 : vector<2x32xf32> to vector<1x2x32xf32>
    tpu.vector_store %arg6[%385, %c0_155, %c0_156], %388 {strides = array<i32>} : memref<8x2x32xf32, #tpu.memory_space<vmem>>, vector<1x2x32xf32>,
    %c8_i32 = arith.constant 8 : i32
    %c0_157 = arith.constant 0 : index
    %c0_158 = arith.constant 0 : index
    %389 = vector.load %arg9[%c0_157, %c0_158] : memref<2x32xf32, #tpu.memory_space<vmem>>, vector<2x32xf32>
    tpu.vector_store %arg9[%c0_157, %c0_158], %384 {strides = array<i32>} : memref<2x32xf32, #tpu.memory_space<vmem>>, vector<2x32xf32>,
    %c0_159 = arith.constant 0 : index
    %c0_160 = arith.constant 0 : index
    %390 = vector.load %arg10[%c0_159, %c0_160] : memref<2x32xf32, #tpu.memory_space<vmem>>, vector<2x32xf32>
    tpu.vector_store %arg10[%c0_159, %c0_160], %382 {strides = array<i32>} : memref<2x32xf32, #tpu.memory_space<vmem>>, vector<2x32xf32>,
    %c0_i32_161 = arith.constant 0 : i32
    %391 = arith.cmpi eq, %arg1, %c0_i32_161 : i32
    %392 = arith.extui %391 : i1 to i32
    %c0_i32_162 = arith.constant 0 : i32
    %393 = arith.cmpi ne, %392, %c0_i32_162 : i32
    scf.if %393 {
      %c0_163 = arith.constant 0 : index
      %c0_164 = arith.constant 0 : index
      %394 = vector.load %arg7[%c0_163, %c0_164] : memref<2x32xf32, #tpu.memory_space<vmem>>, vector<2x32xf32>
      tpu.vector_store %arg7[%c0_163, %c0_164], %384 {strides = array<i32>} : memref<2x32xf32, #tpu.memory_space<vmem>>, vector<2x32xf32>,
      %c0_165 = arith.constant 0 : index
      %c0_166 = arith.constant 0 : index
      %395 = vector.load %arg8[%c0_165, %c0_166] : memref<2x32xf32, #tpu.memory_space<vmem>>, vector<2x32xf32>
      tpu.vector_store %arg8[%c0_165, %c0_166], %382 {strides = array<i32>} : memref<2x32xf32, #tpu.memory_space<vmem>>, vector<2x32xf32>,
    } else {
    }
    return
  }
  func.func @transform_0(%arg0: i32, %arg1: i32) -> (i32, i32, i32) {
    %c0_i32 = arith.constant 0 : i32
    %c0_i32_0 = arith.constant 0 : i32
    return %arg1, %arg0, %c0_i32 : i32, i32, i32
  }
  func.func @transform_1(%arg0: i32, %arg1: i32) -> (i32, i32, i32) {
    %c0_i32 = arith.constant 0 : i32
    %c0_i32_0 = arith.constant 0 : i32
    %c0_i32_1 = arith.constant 0 : i32
    %c0_i32_2 = arith.constant 0 : i32
    return %c0_i32, %c0_i32_0, %c0_i32_1 : i32, i32, i32
  }
  func.func @transform_2(%arg0: i32, %arg1: i32) -> (i32, i32, i32) {
    %c0_i32 = arith.constant 0 : i32
    %c0_i32_0 = arith.constant 0 : i32
    %c0_i32_1 = arith.constant 0 : i32
    %c0_i32_2 = arith.constant 0 : i32
    return %c0_i32, %c0_i32_0, %c0_i32_1 : i32, i32, i32
  }
  func.func @transform_3(%arg0: i32, %arg1: i32) -> (i32, i32, i32) {
    %c0_i32 = arith.constant 0 : i32
    %c0_i32_0 = arith.constant 0 : i32
    %c0_i32_1 = arith.constant 0 : i32
    %c0_i32_2 = arith.constant 0 : i32
    return %c0_i32, %c0_i32_0, %c0_i32_1 : i32, i32, i32
  }
  func.func @transform_4(%arg0: i32, %arg1: i32) -> (i32, i32, i32) {
    %c0_i32 = arith.constant 0 : i32
    %c0_i32_0 = arith.constant 0 : i32
    return %arg1, %arg0, %c0_i32 : i32, i32, i32
  }
  func.func @transform_5(%arg0: i32, %arg1: i32) -> (i32, i32) {
    %c0_i32 = arith.constant 0 : i32
    %c0_i32_0 = arith.constant 0 : i32
    return %arg0, %c0_i32 : i32, i32
  }
  func.func @transform_6(%arg0: i32, %arg1: i32) -> (i32, i32) {
    %c0_i32 = arith.constant 0 : i32
    %c0_i32_0 = arith.constant 0 : i32
    return %arg0, %c0_i32 : i32, i32
  }
}

</mosaic_0001>

<llo_original>
// kernel: tpu_custom_call.1
$region0: #{tpu_custom_call.1}
  #allocation0 [shape = 'u32[]', space=smem, size = 0x4, offset = 0x4, fixed_abs, tag = 'smem constant byte address 0x4 - core index']
  #allocation1 [shape = 'u32[72,128]{1,0:T(1,128)}', space=vmem, size = 0x9000, scoped, tag = 'internal scratch']
  #allocation2 [shape = 'f32[2,32]{1,0:T(2,128)}', space=vmem, size = 0x400, scoped, tag = 'scratch operand']
  #allocation3 [shape = 'f32[2,32]{1,0:T(2,128)}', space=vmem, size = 0x400, scoped, tag = 'scratch operand']
  %s0 = inlined_call_operand.hbm [shape: f32[8,2,16], index: 0, kind: input, shape index: {}]
  %s1 = inlined_call_operand.hbm [shape: f32[4,16,32], index: 1, kind: input, shape index: {}]
  %s2 = inlined_call_operand.hbm [shape: f32[4,32,32], index: 2, kind: input, shape index: {}]
  %s3 = inlined_call_operand.hbm [shape: f32[4,1,32], index: 3, kind: input, shape index: {}]
  %s4 = inlined_call_operand.hbm [shape: f32[8,2,32], index: 4, kind: output, shape index: {0}]
  %s5 = inlined_call_operand.hbm [shape: f32[2,32], index: 5, kind: output, shape index: {1}]
  %s6 = inlined_call_operand.hbm [shape: f32[2,32], index: 6, kind: output, shape index: {2}]
  %7 = xla_tuple %s4, %s5, %s6
  %s8 = sld [smem:[#allocation0]]
  $region66: #{tpu_custom_call.1} parent=0
    _
  %s10 = ssub.s32 1, %s8
  %s11 = scalar_select 0, %s10, %s8
  $region1: #{tpu_custom_call.1} parent=0
    #allocation4 [shape = 'u8[8192]{0}', space=vmem, size = 0x2000, scoped, tag = 'input window, operand 0, single buffered']
    #allocation5 [shape = 's32[1]{0}', space=sflag, size = 0x4, scoped, tag = 'scoped memory for tpu_custom_call.1']
    #allocation6 [shape = 's32[1]{0}', space=sflag, size = 0x4, scoped, tag = 'scoped memory for tpu_custom_call.1']
    #allocation7 [shape = 'u8[32768]{0}', space=vmem, size = 0x8000, scoped, tag = 'input window, operand 1, single buffered']
    #allocation8 [shape = 's32[1]{0}', space=sflag, size = 0x4, scoped, tag = 'scoped memory for tpu_custom_call.1']
    #allocation9 [shape = 'u8[65536]{0}', space=vmem, size = 0x10000, scoped, tag = 'input window, operand 2, single buffered']
    #allocation10 [shape = 'u8[2048]{0}', space=vmem, size = 0x800, scoped, tag = 'input window, operand 3, single buffered']
    #allocation11 [shape = 's32[1]{0}', space=sflag, size = 0x4, scoped, tag = 'scoped memory for tpu_custom_call.1']
    #allocation12 [shape = 'u8[8192]{0}', space=vmem, size = 0x2000, scoped, tag = 'output window, operand 0, single buffered']
    #allocation13 [shape = 'u8[1024]{0}', space=vmem, size = 0x400, scoped, tag = 'output window, operand 1, single buffered']
    #allocation14 [shape = 's32[1]{0}', space=sflag, size = 0x4, scoped, tag = 'scoped memory for tpu_custom_call.1']
    #allocation15 [shape = 'u8[1024]{0}', space=vmem, size = 0x400, scoped, tag = 'output window, operand 2, single buffered']
    %12 = vsyncpa [#allocation5], 0
    %13 = vsyncpa [#allocation8], 0
    %14 = vsyncpa [#allocation11], 0
    %15 = vsyncpa [#allocation6], 0
    %16 = vsyncpa [#allocation14], 0
    // Predicated region
    $region2: #{tpu_custom_call.1} parent=1 // pred_check
      _
    $region3: #{tpu_custom_call.1} parent=1 // pred_check_branch
      %18 = sbr.rel (0) target = $region5
    $region4: #{tpu_custom_call.1} parent=1 // pred_region
      %20 = vsyncadd [#allocation5], 0
      %s21 = sshll.u32 %s0, 4
      %s22 = int_to_ptr.hbm [resolvable:$true] %s21
      %s23 = sshll.u32 [#allocation4], 4
      %s24 = int_to_ptr.vmem [resolvable:$true] %s23
      %29 = dma.hbm_to_vmem [thread:$0]  %s22, 256, %s24, [#allocation5], 32, 32, 2
    $region5: #{tpu_custom_call.1} parent=1 // pred_fallthru
      _
    // Predicated region
    $region6: #{tpu_custom_call.1} parent=1 // pred_check
      _
    $region7: #{tpu_custom_call.1} parent=1 // pred_check_branch
      %31 = sbr.rel (0) target = $region9
    $region8: #{tpu_custom_call.1} parent=1 // pred_region
      %33 = vsyncadd [#allocation8], 0
      %s34 = sshll.u32 %s1, 4
      %s35 = int_to_ptr.hbm [resolvable:$true] %s34
      %s36 = sshll.u32 [#allocation7], 4
      %s37 = int_to_ptr.vmem [resolvable:$true] %s36
      %42 = dma.hbm_to_vmem [thread:$0]  %s35, 1024, %s37, [#allocation8], 128, 128, 8
    $region9: #{tpu_custom_call.1} parent=1 // pred_fallthru
      _
    // Predicated region
    $region10: #{tpu_custom_call.1} parent=1 // pred_check
      _
    $region11: #{tpu_custom_call.1} parent=1 // pred_check_branch
      %44 = sbr.rel (0) target = $region13
    $region12: #{tpu_custom_call.1} parent=1 // pred_region
      %46 = vsyncadd [#allocation8], 0
      %s47 = sshll.u32 %s2, 4
      %s48 = int_to_ptr.hbm [resolvable:$true] %s47
      %s49 = sshll.u32 [#allocation9], 4
      %s50 = int_to_ptr.vmem [resolvable:$true] %s49
      %55 = dma.hbm_to_vmem [thread:$0]  %s48, 2048, %s50, [#allocation8], 128, 128, 8
    $region13: #{tpu_custom_call.1} parent=1 // pred_fallthru
      _
    // Predicated region
    $region14: #{tpu_custom_call.1} parent=1 // pred_check
      _
    $region15: #{tpu_custom_call.1} parent=1 // pred_check_branch
      %57 = sbr.rel (0) target = $region17
    $region16: #{tpu_custom_call.1} parent=1 // pred_region
      %59 = vsyncadd [#allocation11], 0
      %s60 = sshll.u32 %s3, 4
      %s61 = int_to_ptr.hbm [resolvable:$true] %s60
      %s62 = sshll.u32 [#allocation10], 4
      %s63 = int_to_ptr.vmem [resolvable:$true] %s62
      %68 = dma.hbm_to_vmem [thread:$0]  %s61, 64, %s63, [#allocation11], 16, 16, 1
    $region17: #{tpu_custom_call.1} parent=1 // pred_fallthru
      _
    // Predicated region
    $region18: #{tpu_custom_call.1} parent=1 // pred_check
      _
    $region19: #{tpu_custom_call.1} parent=1 // pred_check_branch
      %70 = sbr.rel (0) target = $region21
    $region20: #{tpu_custom_call.1} parent=1 // pred_region
      %72 = dma.done [#allocation5], 256
    $region21: #{tpu_custom_call.1} parent=1 // pred_fallthru
      _
    // Predicated region
    $region22: #{tpu_custom_call.1} parent=1 // pred_check
      _
    $region23: #{tpu_custom_call.1} parent=1 // pred_check_branch
      %74 = sbr.rel (0) target = $region25
    $region24: #{tpu_custom_call.1} parent=1 // pred_region
      %76 = dma.done [#allocation8], 1024
    $region25: #{tpu_custom_call.1} parent=1 // pred_fallthru
      _
    // Predicated region
    $region26: #{tpu_custom_call.1} parent=1 // pred_check
      _
    $region27: #{tpu_custom_call.1} parent=1 // pred_check_branch
      %78 = sbr.rel (0) target = $region29
    $region28: #{tpu_custom_call.1} parent=1 // pred_region
      %80 = dma.done [#allocation8], 2048
    $region29: #{tpu_custom_call.1} parent=1 // pred_fallthru
      _
    // Predicated region
    $region30: #{tpu_custom_call.1} parent=1 // pred_check
      _
    $region31: #{tpu_custom_call.1} parent=1 // pred_check_branch
      %82 = sbr.rel (0) target = $region33
    $region32: #{tpu_custom_call.1} parent=1 // pred_region
      %84 = dma.done [#allocation11], 64
    $region33: #{tpu_custom_call.1} parent=1 // pred_fallthru
      _
    %p85 = scmp.eq.s32.totalorder 0, 0
    // Predicated region
    $region34: #{tpu_custom_call.1} parent=1 // pred_check
      %p86 = pneg %p85
    $region35: #{tpu_custom_call.1} parent=1 // pred_check_branch
      %88 = sbr.rel (%p86) target = $region37
    $region36: #{tpu_custom_call.1} parent=1 // pred_region
      %vm89 = vcmask 254976
      %90 = vst.msk [vmem:[#allocation2] sm:$0x3] %vm89, 0.0
      %91 = vst.msk [vmem:[#allocation3] sm:$0x3] %vm89, 0.0
    $region37: #{tpu_custom_call.1} parent=1 // pred_fallthru
      _
    %v92 = vld [vmem:[#allocation7] sm:$0xff]
    %v93 = vld [vmem:[#allocation7 + $0x8] sm:$0xff]
    %s94 = scalar_lea.vmem [#allocation7], 16
    %v95 = vld [vmem:[%s94] sm:$0xff]
    %v96 = vld [vmem:[%s94 + $0x8] sm:$0xff]
    %s97 = scalar_lea.vmem [#allocation7], 32
    %v98 = vld [vmem:[%s97] sm:$0xff]
    %v99 = vld [vmem:[%s97 + $0x8] sm:$0xff]
    %s100 = scalar_lea.vmem [#allocation7], 48
    %v101 = vld [vmem:[%s100] sm:$0xff]
    %v102 = vld [vmem:[%s100 + $0x8] sm:$0xff]
    %v103 = vld [vmem:[#allocation9] sm:$0xff]
    %v104 = vld [vmem:[#allocation9 + $0x8] sm:$0xff]
    %v105 = vld [vmem:[#allocation9 + $0x10] sm:$0xff]
    %v106 = vld [vmem:[#allocation9 + $0x18] sm:$0xff]
    %s107 = scalar_lea.vmem [#allocation9], 32
    %v108 = vld [vmem:[%s107] sm:$0xff]
    %v109 = vld [vmem:[%s107 + $0x8] sm:$0xff]
    %v110 = vld [vmem:[%s107 + $0x10] sm:$0xff]
    %v111 = vld [vmem:[%s107 + $0x18] sm:$0xff]
    %s112 = scalar_lea.vmem [#allocation9], 64
    %v113 = vld [vmem:[%s112] sm:$0xff]
    %v114 = vld [vmem:[%s112 + $0x8] sm:$0xff]
    %v115 = vld [vmem:[%s112 + $0x10] sm:$0xff]
    %v116 = vld [vmem:[%s112 + $0x18] sm:$0xff]
    %s117 = scalar_lea.vmem [#allocation9], 96
    %v118 = vld [vmem:[%s117] sm:$0xff]
    %v119 = vld [vmem:[%s117 + $0x8] sm:$0xff]
    %v120 = vld [vmem:[%s117 + $0x10] sm:$0xff]
    %v121 = vld [vmem:[%s117 + $0x18] sm:$0xff]
    %v122 = vld [vmem:[#allocation10] sm:$0x1]
    %v124 = vperm.slane %v122, 0
    %s126 = scalar_lea.vmem [#allocation10], 1
    %v127 = vld [vmem:[%s126] sm:$0x1]
    %v129 = vperm.slane %v127, 0
    %s131 = scalar_lea.vmem [#allocation10], 2
    %v132 = vld [vmem:[%s131] sm:$0x1]
    %v134 = vperm.slane %v132, 0
    %s136 = scalar_lea.vmem [#allocation10], 3
    %v137 = vld [vmem:[%s136] sm:$0x1]
    %v139 = vperm.slane %v137, 0
    %v141 = vld [vmem:[#allocation2] sm:$0x3]
    %v142 = vld [vmem:[#allocation3] sm:$0x3]
    %v143 = vld [vmem:[#allocation4] sm:$0x3]
    %vm144 = vcmask 261120
    %v146 = vsel %vm144, %v141, 0
    %148 = vmatpush.msra.mxu0 0.0
    %149 = vmatpush.msra.mxu0 0.0
    %150 = vmatpush.msra.mxu0 0.0
    %151 = vmatpush.msra.mxu0 0.0
    %152 = vmatpush.msra.mxu0 0.0
    %153 = vmatpush.msra.mxu0 0.0
    %154 = vmatpush.msra.mxu0 0.0
    %155 = vmatpush.msra.mxu0 0.0
    %156 = vmatpush.msra.mxu0 0.0
    %157 = vmatpush.msra.mxu0 0.0
    %158 = vmatpush.msra.mxu0 0.0
    %159 = vmatpush.msra.mxu0 0.0
    %160 = vmatpush.msra.mxu0 %v106
    %161 = vmatpush.msra.mxu0 %v105
    %162 = vmatpush.msra.mxu0 %v104
    %163 = vmatpush.msra.mxu0 %v103
    %164 = vmatmul.f32.gmra.mxu0 %v146
    %v165 = vpop.f32.mrf.mxu0
    %v166 = vadd.f32 0.0, %v165
    %167 = vdwg.mxu0
    %vm168 = vcmask 130048
    %v170 = vsel %vm168, %v143, 0
    %172 = vmatpush.msra.mxu0 0.0
    %173 = vmatpush.msra.mxu0 0.0
    %174 = vmatpush.msra.mxu0 0.0
    %175 = vmatpush.msra.mxu0 0.0
    %176 = vmatpush.msra.mxu0 0.0
    %177 = vmatpush.msra.mxu0 0.0
    %178 = vmatpush.msra.mxu0 0.0
    %179 = vmatpush.msra.mxu0 0.0
    %180 = vmatpush.msra.mxu0 0.0
    %181 = vmatpush.msra.mxu0 0.0
    %182 = vmatpush.msra.mxu0 0.0
    %183 = vmatpush.msra.mxu0 0.0
    %184 = vmatpush.msra.mxu0 0.0
    %185 = vmatpush.msra.mxu0 0.0
    %186 = vmatpush.msra.mxu0 %v93
    %187 = vmatpush.msra.mxu0 %v92
    %188 = vmatmul.f32.gmra.mxu0 %v170
    %v189 = vpop.f32.mrf.mxu0
    %v190 = vadd.f32 %v166, %v189
    %191 = vdwg.mxu0
    %v192 = vadd.f32 %v190, %v124
    %v193 = vxor.u32 %v192, 2147483648
    %v194 = vmul.f32 %v193, 1.442695
    %v195 = vpow.pop %v194
    %v196 = vadd.f32 %v195, 1.0
    %v197 = vrcp.pop %v196
    %v198 = vmul.f32 %v196, %v197
    %v199 = vsub.f32 1.0, %v198
    %v200 = vmul.f32 %v197, %v199
    %v201 = vadd.f32 %v197, %v200
    %vm202 = vweird.f32 %v196
    %vm203 = vweird.f32 %v197
    %vm204 = vmor %vm202, %vm203
    %v205 = vsel %vm204, %v197, %v201
    %v206 = vand.u32 2147483647, %v196
    %vm207 = vcmp.eq.f32.partialorder %v206, 8.507059e+37
    %v208 = vand.u32 %v196, 2147483648
    %v209 = vor.u32 1.1754944e-38, %v208
    %v210 = vsel %vm207, %v209, %v205
    %v211 = vmul.f32 1.0, %v210
    %212 = vmatpush.msra.mxu0 0.0
    %213 = vmatpush.msra.mxu0 0.0
    %214 = vmatpush.msra.mxu0 0.0
    %215 = vmatpush.msra.mxu0 0.0
    %216 = vmatpush.msra.mxu0 0.0
    %217 = vmatpush.msra.mxu0 0.0
    %218 = vmatpush.msra.mxu0 0.0
    %219 = vmatpush.msra.mxu0 0.0
    %220 = vmatpush.msra.mxu0 0.0
    %221 = vmatpush.msra.mxu0 0.0
    %222 = vmatpush.msra.mxu0 0.0
    %223 = vmatpush.msra.mxu0 0.0
    %224 = vmatpush.msra.mxu0 %v111
    %225 = vmatpush.msra.mxu0 %v110
    %226 = vmatpush.msra.mxu0 %v109
    %227 = vmatpush.msra.mxu0 %v108
    %228 = vmatmul.f32.gmra.mxu0 %v146
    %v229 = vpop.f32.mrf.mxu0
    %v230 = vadd.f32 0.0, %v229
    %231 = vdwg.mxu0
    %232 = vmatpush.msra.mxu0 0.0
    %233 = vmatpush.msra.mxu0 0.0
    %234 = vmatpush.msra.mxu0 0.0
    %235 = vmatpush.msra.mxu0 0.0
    %236 = vmatpush.msra.mxu0 0.0
    %237 = vmatpush.msra.mxu0 0.0
    %238 = vmatpush.msra.mxu0 0.0
    %239 = vmatpush.msra.mxu0 0.0
    %240 = vmatpush.msra.mxu0 0.0
    %241 = vmatpush.msra.mxu0 0.0
    %242 = vmatpush.msra.mxu0 0.0
    %243 = vmatpush.msra.mxu0 0.0
    %244 = vmatpush.msra.mxu0 0.0
    %245 = vmatpush.msra.mxu0 0.0
    %246 = vmatpush.msra.mxu0 %v96
    %247 = vmatpush.msra.mxu0 %v95
    %248 = vmatmul.f32.gmra.mxu0 %v170
    %v249 = vpop.f32.mrf.mxu0
    %v250 = vadd.f32 %v230, %v249
    %251 = vdwg.mxu0
    %v252 = vadd.f32 %v250, %v129
    %v253 = vxor.u32 %v252, 2147483648
    %v254 = vmul.f32 %v253, 1.442695
    %v255 = vpow.pop %v254
    %v256 = vadd.f32 %v255, 1.0
    %v257 = vrcp.pop %v256
    %v258 = vmul.f32 %v256, %v257
    %v259 = vsub.f32 1.0, %v258
    %v260 = vmul.f32 %v257, %v259
    %v261 = vadd.f32 %v257, %v260
    %vm262 = vweird.f32 %v256
    %vm263 = vweird.f32 %v257
    %vm264 = vmor %vm262, %vm263
    %v265 = vsel %vm264, %v257, %v261
    %v266 = vand.u32 2147483647, %v256
    %vm267 = vcmp.eq.f32.partialorder %v266, 8.507059e+37
    %v268 = vand.u32 %v256, 2147483648
    %v269 = vor.u32 1.1754944e-38, %v268
    %v270 = vsel %vm267, %v269, %v265
    %v271 = vmul.f32 1.0, %v270
    %272 = vmatpush.msra.mxu0 0.0
    %273 = vmatpush.msra.mxu0 0.0
    %274 = vmatpush.msra.mxu0 0.0
    %275 = vmatpush.msra.mxu0 0.0
    %276 = vmatpush.msra.mxu0 0.0
    %277 = vmatpush.msra.mxu0 0.0
    %278 = vmatpush.msra.mxu0 0.0
    %279 = vmatpush.msra.mxu0 0.0
    %280 = vmatpush.msra.mxu0 0.0
    %281 = vmatpush.msra.mxu0 0.0
    %282 = vmatpush.msra.mxu0 0.0
    %283 = vmatpush.msra.mxu0 0.0
    %284 = vmatpush.msra.mxu0 %v116
    %285 = vmatpush.msra.mxu0 %v115
    %286 = vmatpush.msra.mxu0 %v114
    %287 = vmatpush.msra.mxu0 %v113
    %288 = vmatmul.f32.gmra.mxu0 %v146
    %v289 = vpop.f32.mrf.mxu0
    %v290 = vadd.f32 0.0, %v289
    %291 = vdwg.mxu0
    %292 = vmatpush.msra.mxu0 0.0
    %293 = vmatpush.msra.mxu0 0.0
    %294 = vmatpush.msra.mxu0 0.0
    %295 = vmatpush.msra.mxu0 0.0
    %296 = vmatpush.msra.mxu0 0.0
    %297 = vmatpush.msra.mxu0 0.0
    %298 = vmatpush.msra.mxu0 0.0
    %299 = vmatpush.msra.mxu0 0.0
    %300 = vmatpush.msra.mxu0 0.0
    %301 = vmatpush.msra.mxu0 0.0
    %302 = vmatpush.msra.mxu0 0.0
    %303 = vmatpush.msra.mxu0 0.0
    %304 = vmatpush.msra.mxu0 0.0
    %305 = vmatpush.msra.mxu0 0.0
    %306 = vmatpush.msra.mxu0 %v99
    %307 = vmatpush.msra.mxu0 %v98
    %308 = vmatmul.f32.gmra.mxu0 %v170
    %v309 = vpop.f32.mrf.mxu0
    %v310 = vadd.f32 %v290, %v309
    %311 = vdwg.mxu0
    %v312 = vadd.f32 %v310, %v134
    %v313 = vtanh.pop %v312
    %314 = vmatpush.msra.mxu0 0.0
    %315 = vmatpush.msra.mxu0 0.0
    %316 = vmatpush.msra.mxu0 0.0
    %317 = vmatpush.msra.mxu0 0.0
    %318 = vmatpush.msra.mxu0 0.0
    %319 = vmatpush.msra.mxu0 0.0
    %320 = vmatpush.msra.mxu0 0.0
    %321 = vmatpush.msra.mxu0 0.0
    %322 = vmatpush.msra.mxu0 0.0
    %323 = vmatpush.msra.mxu0 0.0
    %324 = vmatpush.msra.mxu0 0.0
    %325 = vmatpush.msra.mxu0 0.0
    %326 = vmatpush.msra.mxu0 %v121
    %327 = vmatpush.msra.mxu0 %v120
    %328 = vmatpush.msra.mxu0 %v119
    %329 = vmatpush.msra.mxu0 %v118
    %330 = vmatmul.f32.gmra.mxu0 %v146
    %v331 = vpop.f32.mrf.mxu0
    %v332 = vadd.f32 0.0, %v331
    %333 = vdwg.mxu0
    %334 = vmatpush.msra.mxu0 0.0
    %335 = vmatpush.msra.mxu0 0.0
    %336 = vmatpush.msra.mxu0 0.0
    %337 = vmatpush.msra.mxu0 0.0
    %338 = vmatpush.msra.mxu0 0.0
    %339 = vmatpush.msra.mxu0 0.0
    %340 = vmatpush.msra.mxu0 0.0
    %341 = vmatpush.msra.mxu0 0.0
    %342 = vmatpush.msra.mxu0 0.0
    %343 = vmatpush.msra.mxu0 0.0
    %344 = vmatpush.msra.mxu0 0.0
    %345 = vmatpush.msra.mxu0 0.0
    %346 = vmatpush.msra.mxu0 0.0
    %347 = vmatpush.msra.mxu0 0.0
    %348 = vmatpush.msra.mxu0 %v102
    %349 = vmatpush.msra.mxu0 %v101
    %350 = vmatmul.f32.gmra.mxu0 %v170
    %v351 = vpop.f32.mrf.mxu0
    %v352 = vadd.f32 %v332, %v351
    %353 = vdwg.mxu0
    %v354 = vadd.f32 %v352, %v139
    %v355 = vxor.u32 %v354, 2147483648
    %v356 = vmul.f32 %v355, 1.442695
    %v357 = vpow.pop %v356
    %v358 = vadd.f32 %v357, 1.0
    %v359 = vrcp.pop %v358
    %v360 = vmul.f32 %v358, %v359
    %v361 = vsub.f32 1.0, %v360
    %v362 = vmul.f32 %v359, %v361
    %v363 = vadd.f32 %v359, %v362
    %vm364 = vweird.f32 %v358
    %vm365 = vweird.f32 %v359
    %vm366 = vmor %vm364, %vm365
    %v367 = vsel %vm366, %v359, %v363
    %v368 = vand.u32 2147483647, %v358
    %vm369 = vcmp.eq.f32.partialorder %v368, 8.507059e+37
    %v370 = vand.u32 %v358, 2147483648
    %v371 = vor.u32 1.1754944e-38, %v370
    %v372 = vsel %vm369, %v371, %v367
    %v373 = vmul.f32 1.0, %v372
    %v374 = vmul.f32 %v271, %v142
    %v375 = vmul.f32 %v211, %v313
    %v376 = vadd.f32 %v374, %v375
    %v377 = vtanh.pop %v376
    %v378 = vmul.f32 %v373, %v377
    %vm379 = vcmask 254976
    %380 = vst.msk [vmem:[#allocation12] sm:$0x3] %vm379, %v378
    %s381 = scalar_lea.vmem [#allocation4], 2
    %v382 = vld [vmem:[%s381] sm:$0x3]
    %v384 = vsel %vm144, %v378, 0
    %386 = vmatpush.msra.mxu0 0.0
    %387 = vmatpush.msra.mxu0 0.0
    %388 = vmatpush.msra.mxu0 0.0
    %389 = vmatpush.msra.mxu0 0.0
    %390 = vmatpush.msra.mxu0 0.0
    %391 = vmatpush.msra.mxu0 0.0
    %392 = vmatpush.msra.mxu0 0.0
    %393 = vmatpush.msra.mxu0 0.0
    %394 = vmatpush.msra.mxu0 0.0
    %395 = vmatpush.msra.mxu0 0.0
    %396 = vmatpush.msra.mxu0 0.0
    %397 = vmatpush.msra.mxu0 0.0
    %398 = vmatpush.msra.mxu0 %v106
    %399 = vmatpush.msra.mxu0 %v105
    %400 = vmatpush.msra.mxu0 %v104
    %401 = vmatpush.msra.mxu0 %v103
    %402 = vmatmul.f32.gmra.mxu0 %v384
    %v403 = vpop.f32.mrf.mxu0
    %v404 = vadd.f32 0.0, %v403
    %405 = vdwg.mxu0
    %v407 = vsel %vm168, %v382, 0
    %409 = vmatpush.msra.mxu0 0.0
    %410 = vmatpush.msra.mxu0 0.0
    %411 = vmatpush.msra.mxu0 0.0
    %412 = vmatpush.msra.mxu0 0.0
    %413 = vmatpush.msra.mxu0 0.0
    %414 = vmatpush.msra.mxu0 0.0
    %415 = vmatpush.msra.mxu0 0.0
    %416 = vmatpush.msra.mxu0 0.0
    %417 = vmatpush.msra.mxu0 0.0
    %418 = vmatpush.msra.mxu0 0.0
    %419 = vmatpush.msra.mxu0 0.0
    %420 = vmatpush.msra.mxu0 0.0
    %421 = vmatpush.msra.mxu0 0.0
    %422 = vmatpush.msra.mxu0 0.0
    %423 = vmatpush.msra.mxu0 %v93
    %424 = vmatpush.msra.mxu0 %v92
    %425 = vmatmul.f32.gmra.mxu0 %v407
    %v426 = vpop.f32.mrf.mxu0
    %v427 = vadd.f32 %v404, %v426
    %428 = vdwg.mxu0
    %v429 = vadd.f32 %v427, %v124
    %v430 = vxor.u32 %v429, 2147483648
    %v431 = vmul.f32 %v430, 1.442695
    %v432 = vpow.pop %v431
    %v433 = vadd.f32 %v432, 1.0
    %v434 = vrcp.pop %v433
    %v435 = vmul.f32 %v433, %v434
    %v436 = vsub.f32 1.0, %v435
    %v437 = vmul.f32 %v434, %v436
    %v438 = vadd.f32 %v434, %v437
    %vm439 = vweird.f32 %v433
    %vm440 = vweird.f32 %v434
    %vm441 = vmor %vm439, %vm440
    %v442 = vsel %vm441, %v434, %v438
    %v443 = vand.u32 2147483647, %v433
    %vm444 = vcmp.eq.f32.partialorder %v443, 8.507059e+37
    %v445 = vand.u32 %v433, 2147483648
    %v446 = vor.u32 1.1754944e-38, %v445
    %v447 = vsel %vm444, %v446, %v442
    %v448 = vmul.f32 1.0, %v447
    %449 = vmatpush.msra.mxu0 0.0
    %450 = vmatpush.msra.mxu0 0.0
    %451 = vmatpush.msra.mxu0 0.0
    %452 = vmatpush.msra.mxu0 0.0
    %453 = vmatpush.msra.mxu0 0.0
    %454 = vmatpush.msra.mxu0 0.0
    %455 = vmatpush.msra.mxu0 0.0
    %456 = vmatpush.msra.mxu0 0.0
    %457 = vmatpush.msra.mxu0 0.0
    %458 = vmatpush.msra.mxu0 0.0
    %459 = vmatpush.msra.mxu0 0.0
    %460 = vmatpush.msra.mxu0 0.0
    %461 = vmatpush.msra.mxu0 %v111
    %462 = vmatpush.msra.mxu0 %v110
    %463 = vmatpush.msra.mxu0 %v109
    %464 = vmatpush.msra.mxu0 %v108
    %465 = vmatmul.f32.gmra.mxu0 %v384
    %v466 = vpop.f32.mrf.mxu0
    %v467 = vadd.f32 0.0, %v466
    %468 = vdwg.mxu0
    %469 = vmatpush.msra.mxu0 0.0
    %470 = vmatpush.msra.mxu0 0.0
    %471 = vmatpush.msra.mxu0 0.0
    %472 = vmatpush.msra.mxu0 0.0
    %473 = vmatpush.msra.mxu0 0.0
    %474 = vmatpush.msra.mxu0 0.0
    %475 = vmatpush.msra.mxu0 0.0
    %476 = vmatpush.msra.mxu0 0.0
    %477 = vmatpush.msra.mxu0 0.0
    %478 = vmatpush.msra.mxu0 0.0
    %479 = vmatpush.msra.mxu0 0.0
    %480 = vmatpush.msra.mxu0 0.0
    %481 = vmatpush.msra.mxu0 0.0
    %482 = vmatpush.msra.mxu0 0.0
    %483 = vmatpush.msra.mxu0 %v96
    %484 = vmatpush.msra.mxu0 %v95
    %485 = vmatmul.f32.gmra.mxu0 %v407
    %v486 = vpop.f32.mrf.mxu0
    %v487 = vadd.f32 %v467, %v486
    %488 = vdwg.mxu0
    %v489 = vadd.f32 %v487, %v129
    %v490 = vxor.u32 %v489, 2147483648
    %v491 = vmul.f32 %v490, 1.442695
    %v492 = vpow.pop %v491
    %v493 = vadd.f32 %v492, 1.0
    %v494 = vrcp.pop %v493
    %v495 = vmul.f32 %v493, %v494
    %v496 = vsub.f32 1.0, %v495
    %v497 = vmul.f32 %v494, %v496
    %v498 = vadd.f32 %v494, %v497
    %vm499 = vweird.f32 %v493
    %vm500 = vweird.f32 %v494
    %vm501 = vmor %vm499, %vm500
    %v502 = vsel %vm501, %v494, %v498
    %v503 = vand.u32 2147483647, %v493
    %vm504 = vcmp.eq.f32.partialorder %v503, 8.507059e+37
    %v505 = vand.u32 %v493, 2147483648
    %v506 = vor.u32 1.1754944e-38, %v505
    %v507 = vsel %vm504, %v506, %v502
    %v508 = vmul.f32 1.0, %v507
    %509 = vmatpush.msra.mxu0 0.0
    %510 = vmatpush.msra.mxu0 0.0
    %511 = vmatpush.msra.mxu0 0.0
    %512 = vmatpush.msra.mxu0 0.0
    %513 = vmatpush.msra.mxu0 0.0
    %514 = vmatpush.msra.mxu0 0.0
    %515 = vmatpush.msra.mxu0 0.0
    %516 = vmatpush.msra.mxu0 0.0
    %517 = vmatpush.msra.mxu0 0.0
    %518 = vmatpush.msra.mxu0 0.0
    %519 = vmatpush.msra.mxu0 0.0
    %520 = vmatpush.msra.mxu0 0.0
    %521 = vmatpush.msra.mxu0 %v116
    %522 = vmatpush.msra.mxu0 %v115
    %523 = vmatpush.msra.mxu0 %v114
    %524 = vmatpush.msra.mxu0 %v113
    %525 = vmatmul.f32.gmra.mxu0 %v384
    %v526 = vpop.f32.mrf.mxu0
    %v527 = vadd.f32 0.0, %v526
    %528 = vdwg.mxu0
    %529 = vmatpush.msra.mxu0 0.0
    %530 = vmatpush.msra.mxu0 0.0
    %531 = vmatpush.msra.mxu0 0.0
    %532 = vmatpush.msra.mxu0 0.0
    %533 = vmatpush.msra.mxu0 0.0
    %534 = vmatpush.msra.mxu0 0.0
    %535 = vmatpush.msra.mxu0 0.0
    %536 = vmatpush.msra.mxu0 0.0
    %537 = vmatpush.msra.mxu0 0.0
    %538 = vmatpush.msra.mxu0 0.0
    %539 = vmatpush.msra.mxu0 0.0
    %540 = vmatpush.msra.mxu0 0.0
    %541 = vmatpush.msra.mxu0 0.0
    %542 = vmatpush.msra.mxu0 0.0
    %543 = vmatpush.msra.mxu0 %v99
    %544 = vmatpush.msra.mxu0 %v98
    %545 = vmatmul.f32.gmra.mxu0 %v407
    %v546 = vpop.f32.mrf.mxu0
    %v547 = vadd.f32 %v527, %v546
    %548 = vdwg.mxu0
    %v549 = vadd.f32 %v547, %v134
    %v550 = vtanh.pop %v549
    %551 = vmatpush.msra.mxu0 0.0
    %552 = vmatpush.msra.mxu0 0.0
    %553 = vmatpush.msra.mxu0 0.0
    %554 = vmatpush.msra.mxu0 0.0
    %555 = vmatpush.msra.mxu0 0.0
    %556 = vmatpush.msra.mxu0 0.0
    %557 = vmatpush.msra.mxu0 0.0
    %558 = vmatpush.msra.mxu0 0.0
    %559 = vmatpush.msra.mxu0 0.0
    %560 = vmatpush.msra.mxu0 0.0
    %561 = vmatpush.msra.mxu0 0.0
    %562 = vmatpush.msra.mxu0 0.0
    %563 = vmatpush.msra.mxu0 %v121
    %564 = vmatpush.msra.mxu0 %v120
    %565 = vmatpush.msra.mxu0 %v119
    %566 = vmatpush.msra.mxu0 %v118
    %567 = vmatmul.f32.gmra.mxu0 %v384
    %v568 = vpop.f32.mrf.mxu0
    %v569 = vadd.f32 0.0, %v568
    %570 = vdwg.mxu0
    %571 = vmatpush.msra.mxu0 0.0
    %572 = vmatpush.msra.mxu0 0.0
    %573 = vmatpush.msra.mxu0 0.0
    %574 = vmatpush.msra.mxu0 0.0
    %575 = vmatpush.msra.mxu0 0.0
    %576 = vmatpush.msra.mxu0 0.0
    %577 = vmatpush.msra.mxu0 0.0
    %578 = vmatpush.msra.mxu0 0.0
    %579 = vmatpush.msra.mxu0 0.0
    %580 = vmatpush.msra.mxu0 0.0
    %581 = vmatpush.msra.mxu0 0.0
    %582 = vmatpush.msra.mxu0 0.0
    %583 = vmatpush.msra.mxu0 0.0
    %584 = vmatpush.msra.mxu0 0.0
    %585 = vmatpush.msra.mxu0 %v102
    %586 = vmatpush.msra.mxu0 %v101
    %587 = vmatmul.f32.gmra.mxu0 %v407
    %v588 = vpop.f32.mrf.mxu0
    %v589 = vadd.f32 %v569, %v588
    %590 = vdwg.mxu0
    %v591 = vadd.f32 %v589, %v139
    %v592 = vxor.u32 %v591, 2147483648
    %v593 = vmul.f32 %v592, 1.442695
    %v594 = vpow.pop %v593
    %v595 = vadd.f32 %v594, 1.0
    %v596 = vrcp.pop %v595
    %v597 = vmul.f32 %v595, %v596
    %v598 = vsub.f32 1.0, %v597
    %v599 = vmul.f32 %v596, %v598
    %v600 = vadd.f32 %v596, %v599
    %vm601 = vweird.f32 %v595
    %vm602 = vweird.f32 %v596
    %vm603 = vmor %vm601, %vm602
    %v604 = vsel %vm603, %v596, %v600
    %v605 = vand.u32 2147483647, %v595
    %vm606 = vcmp.eq.f32.partialorder %v605, 8.507059e+37
    %v607 = vand.u32 %v595, 2147483648
    %v608 = vor.u32 1.1754944e-38, %v607
    %v609 = vsel %vm606, %v608, %v604
    %v610 = vmul.f32 1.0, %v609
    %v611 = vmul.f32 %v508, %v376
    %v612 = vmul.f32 %v448, %v550
    %v613 = vadd.f32 %v611, %v612
    %v614 = vtanh.pop %v613
    %v615 = vmul.f32 %v610, %v614
    %s616 = scalar_lea.vmem [#allocation12], 2
    %617 = vst.msk [vmem:[%s616] sm:$0x3] %vm379, %v615
    %s618 = scalar_lea.vmem [#allocation4], 4
    %v619 = vld [vmem:[%s618] sm:$0x3]
    %v621 = vsel %vm144, %v615, 0
    %623 = vmatpush.msra.mxu0 0.0
    %624 = vmatpush.msra.mxu0 0.0
    %625 = vmatpush.msra.mxu0 0.0
    %626 = vmatpush.msra.mxu0 0.0
    %627 = vmatpush.msra.mxu0 0.0
    %628 = vmatpush.msra.mxu0 0.0
    %629 = vmatpush.msra.mxu0 0.0
    %630 = vmatpush.msra.mxu0 0.0
    %631 = vmatpush.msra.mxu0 0.0
    %632 = vmatpush.msra.mxu0 0.0
    %633 = vmatpush.msra.mxu0 0.0
    %634 = vmatpush.msra.mxu0 0.0
    %635 = vmatpush.msra.mxu0 %v106
    %636 = vmatpush.msra.mxu0 %v105
    %637 = vmatpush.msra.mxu0 %v104
    %638 = vmatpush.msra.mxu0 %v103
    %639 = vmatmul.f32.gmra.mxu0 %v621
    %v640 = vpop.f32.mrf.mxu0
    %v641 = vadd.f32 0.0, %v640
    %642 = vdwg.mxu0
    %v644 = vsel %vm168, %v619, 0
    %646 = vmatpush.msra.mxu0 0.0
    %647 = vmatpush.msra.mxu0 0.0
    %648 = vmatpush.msra.mxu0 0.0
    %649 = vmatpush.msra.mxu0 0.0
    %650 = vmatpush.msra.mxu0 0.0
    %651 = vmatpush.msra.mxu0 0.0
    %652 = vmatpush.msra.mxu0 0.0
    %653 = vmatpush.msra.mxu0 0.0
    %654 = vmatpush.msra.mxu0 0.0
    %655 = vmatpush.msra.mxu0 0.0
    %656 = vmatpush.msra.mxu0 0.0
    %657 = vmatpush.msra.mxu0 0.0
    %658 = vmatpush.msra.mxu0 0.0
    %659 = vmatpush.msra.mxu0 0.0
    %660 = vmatpush.msra.mxu0 %v93
    %661 = vmatpush.msra.mxu0 %v92
    %662 = vmatmul.f32.gmra.mxu0 %v644
    %v663 = vpop.f32.mrf.mxu0
    %v664 = vadd.f32 %v641, %v663
    %665 = vdwg.mxu0
    %v666 = vadd.f32 %v664, %v124
    %v667 = vxor.u32 %v666, 2147483648
    %v668 = vmul.f32 %v667, 1.442695
    %v669 = vpow.pop %v668
    %v670 = vadd.f32 %v669, 1.0
    %v671 = vrcp.pop %v670
    %v672 = vmul.f32 %v670, %v671
    %v673 = vsub.f32 1.0, %v672
    %v674 = vmul.f32 %v671, %v673
    %v675 = vadd.f32 %v671, %v674
    %vm676 = vweird.f32 %v670
    %vm677 = vweird.f32 %v671
    %vm678 = vmor %vm676, %vm677
    %v679 = vsel %vm678, %v671, %v675
    %v680 = vand.u32 2147483647, %v670
    %vm681 = vcmp.eq.f32.partialorder %v680, 8.507059e+37
    %v682 = vand.u32 %v670, 2147483648
    %v683 = vor.u32 1.1754944e-38, %v682
    %v684 = vsel %vm681, %v683, %v679
    %v685 = vmul.f32 1.0, %v684
    %686 = vmatpush.msra.mxu0 0.0
    %687 = vmatpush.msra.mxu0 0.0
    %688 = vmatpush.msra.mxu0 0.0
    %689 = vmatpush.msra.mxu0 0.0
    %690 = vmatpush.msra.mxu0 0.0
    %691 = vmatpush.msra.mxu0 0.0
    %692 = vmatpush.msra.mxu0 0.0
    %693 = vmatpush.msra.mxu0 0.0
    %694 = vmatpush.msra.mxu0 0.0
    %695 = vmatpush.msra.mxu0 0.0
    %696 = vmatpush.msra.mxu0 0.0
    %697 = vmatpush.msra.mxu0 0.0
    %698 = vmatpush.msra.mxu0 %v111
    %699 = vmatpush.msra.mxu0 %v110
    %700 = vmatpush.msra.mxu0 %v109
    %701 = vmatpush.msra.mxu0 %v108
    %702 = vmatmul.f32.gmra.mxu0 %v621
    %v703 = vpop.f32.mrf.mxu0
    %v704 = vadd.f32 0.0, %v703
    %705 = vdwg.mxu0
    %706 = vmatpush.msra.mxu0 0.0
    %707 = vmatpush.msra.mxu0 0.0
    %708 = vmatpush.msra.mxu0 0.0
    %709 = vmatpush.msra.mxu0 0.0
    %710 = vmatpush.msra.mxu0 0.0
    %711 = vmatpush.msra.mxu0 0.0
    %712 = vmatpush.msra.mxu0 0.0
    %713 = vmatpush.msra.mxu0 0.0
    %714 = vmatpush.msra.mxu0 0.0
    %715 = vmatpush.msra.mxu0 0.0
    %716 = vmatpush.msra.mxu0 0.0
    %717 = vmatpush.msra.mxu0 0.0
    %718 = vmatpush.msra.mxu0 0.0
    %719 = vmatpush.msra.mxu0 0.0
    %720 = vmatpush.msra.mxu0 %v96
    %721 = vmatpush.msra.mxu0 %v95
    %722 = vmatmul.f32.gmra.mxu0 %v644
    %v723 = vpop.f32.mrf.mxu0
    %v724 = vadd.f32 %v704, %v723
    %725 = vdwg.mxu0
    %v726 = vadd.f32 %v724, %v129
    %v727 = vxor.u32 %v726, 2147483648
    %v728 = vmul.f32 %v727, 1.442695
    %v729 = vpow.pop %v728
    %v730 = vadd.f32 %v729, 1.0
    %v731 = vrcp.pop %v730
    %v732 = vmul.f32 %v730, %v731
    %v733 = vsub.f32 1.0, %v732
    %v734 = vmul.f32 %v731, %v733
    %v735 = vadd.f32 %v731, %v734
    %vm736 = vweird.f32 %v730
    %vm737 = vweird.f32 %v731
    %vm738 = vmor %vm736, %vm737
    %v739 = vsel %vm738, %v731, %v735
    %v740 = vand.u32 2147483647, %v730
    %vm741 = vcmp.eq.f32.partialorder %v740, 8.507059e+37
    %v742 = vand.u32 %v730, 2147483648
    %v743 = vor.u32 1.1754944e-38, %v742
    %v744 = vsel %vm741, %v743, %v739
    %v745 = vmul.f32 1.0, %v744
    %746 = vmatpush.msra.mxu0 0.0
    %747 = vmatpush.msra.mxu0 0.0
    %748 = vmatpush.msra.mxu0 0.0
    %749 = vmatpush.msra.mxu0 0.0
    %750 = vmatpush.msra.mxu0 0.0
    %751 = vmatpush.msra.mxu0 0.0
    %752 = vmatpush.msra.mxu0 0.0
    %753 = vmatpush.msra.mxu0 0.0
    %754 = vmatpush.msra.mxu0 0.0
    %755 = vmatpush.msra.mxu0 0.0
    %756 = vmatpush.msra.mxu0 0.0
    %757 = vmatpush.msra.mxu0 0.0
    %758 = vmatpush.msra.mxu0 %v116
    %759 = vmatpush.msra.mxu0 %v115
    %760 = vmatpush.msra.mxu0 %v114
    %761 = vmatpush.msra.mxu0 %v113
    %762 = vmatmul.f32.gmra.mxu0 %v621
    %v763 = vpop.f32.mrf.mxu0
    %v764 = vadd.f32 0.0, %v763
    %765 = vdwg.mxu0
    %766 = vmatpush.msra.mxu0 0.0
    %767 = vmatpush.msra.mxu0 0.0
    %768 = vmatpush.msra.mxu0 0.0
    %769 = vmatpush.msra.mxu0 0.0
    %770 = vmatpush.msra.mxu0 0.0
    %771 = vmatpush.msra.mxu0 0.0
    %772 = vmatpush.msra.mxu0 0.0
    %773 = vmatpush.msra.mxu0 0.0
    %774 = vmatpush.msra.mxu0 0.0
    %775 = vmatpush.msra.mxu0 0.0
    %776 = vmatpush.msra.mxu0 0.0
    %777 = vmatpush.msra.mxu0 0.0
    %778 = vmatpush.msra.mxu0 0.0
    %779 = vmatpush.msra.mxu0 0.0
    %780 = vmatpush.msra.mxu0 %v99
    %781 = vmatpush.msra.mxu0 %v98
    %782 = vmatmul.f32.gmra.mxu0 %v644
    %v783 = vpop.f32.mrf.mxu0
    %v784 = vadd.f32 %v764, %v783
    %785 = vdwg.mxu0
    %v786 = vadd.f32 %v784, %v134
    %v787 = vtanh.pop %v786
    %788 = vmatpush.msra.mxu0 0.0
    %789 = vmatpush.msra.mxu0 0.0
    %790 = vmatpush.msra.mxu0 0.0
    %791 = vmatpush.msra.mxu0 0.0
    %792 = vmatpush.msra.mxu0 0.0
    %793 = vmatpush.msra.mxu0 0.0
    %794 = vmatpush.msra.mxu0 0.0
    %795 = vmatpush.msra.mxu0 0.0
    %796 = vmatpush.msra.mxu0 0.0
    %797 = vmatpush.msra.mxu0 0.0
    %798 = vmatpush.msra.mxu0 0.0
    %799 = vmatpush.msra.mxu0 0.0
    %800 = vmatpush.msra.mxu0 %v121
    %801 = vmatpush.msra.mxu0 %v120
    %802 = vmatpush.msra.mxu0 %v119
    %803 = vmatpush.msra.mxu0 %v118
    %804 = vmatmul.f32.gmra.mxu0 %v621
    %v805 = vpop.f32.mrf.mxu0
    %v806 = vadd.f32 0.0, %v805
    %807 = vdwg.mxu0
    %808 = vmatpush.msra.mxu0 0.0
    %809 = vmatpush.msra.mxu0 0.0
    %810 = vmatpush.msra.mxu0 0.0
    %811 = vmatpush.msra.mxu0 0.0
    %812 = vmatpush.msra.mxu0 0.0
    %813 = vmatpush.msra.mxu0 0.0
    %814 = vmatpush.msra.mxu0 0.0
    %815 = vmatpush.msra.mxu0 0.0
    %816 = vmatpush.msra.mxu0 0.0
    %817 = vmatpush.msra.mxu0 0.0
    %818 = vmatpush.msra.mxu0 0.0
    %819 = vmatpush.msra.mxu0 0.0
    %820 = vmatpush.msra.mxu0 0.0
    %821 = vmatpush.msra.mxu0 0.0
    %822 = vmatpush.msra.mxu0 %v102
    %823 = vmatpush.msra.mxu0 %v101
    %824 = vmatmul.f32.gmra.mxu0 %v644
    %v825 = vpop.f32.mrf.mxu0
    %v826 = vadd.f32 %v806, %v825
    %827 = vdwg.mxu0
    %v828 = vadd.f32 %v826, %v139
    %v829 = vxor.u32 %v828, 2147483648
    %v830 = vmul.f32 %v829, 1.442695
    %v831 = vpow.pop %v830
    %v832 = vadd.f32 %v831, 1.0
    %v833 = vrcp.pop %v832
    %v834 = vmul.f32 %v832, %v833
    %v835 = vsub.f32 1.0, %v834
    %v836 = vmul.f32 %v833, %v835
    %v837 = vadd.f32 %v833, %v836
    %vm838 = vweird.f32 %v832
    %vm839 = vweird.f32 %v833
    %vm840 = vmor %vm838, %vm839
    %v841 = vsel %vm840, %v833, %v837
    %v842 = vand.u32 2147483647, %v832
    %vm843 = vcmp.eq.f32.partialorder %v842, 8.507059e+37
    %v844 = vand.u32 %v832, 2147483648
    %v845 = vor.u32 1.1754944e-38, %v844
    %v846 = vsel %vm843, %v845, %v841
    %v847 = vmul.f32 1.0, %v846
    %v848 = vmul.f32 %v745, %v613
    %v849 = vmul.f32 %v685, %v787
    %v850 = vadd.f32 %v848, %v849
    %v851 = vtanh.pop %v850
    %v852 = vmul.f32 %v847, %v851
    %s853 = scalar_lea.vmem [#allocation12], 4
    %854 = vst.msk [vmem:[%s853] sm:$0x3] %vm379, %v852
    %s855 = scalar_lea.vmem [#allocation4], 6
    %v856 = vld [vmem:[%s855] sm:$0x3]
    %v858 = vsel %vm144, %v852, 0
    %860 = vmatpush.msra.mxu0 0.0
    %861 = vmatpush.msra.mxu0 0.0
    %862 = vmatpush.msra.mxu0 0.0
    %863 = vmatpush.msra.mxu0 0.0
    %864 = vmatpush.msra.mxu0 0.0
    %865 = vmatpush.msra.mxu0 0.0
    %866 = vmatpush.msra.mxu0 0.0
    %867 = vmatpush.msra.mxu0 0.0
    %868 = vmatpush.msra.mxu0 0.0
    %869 = vmatpush.msra.mxu0 0.0
    %870 = vmatpush.msra.mxu0 0.0
    %871 = vmatpush.msra.mxu0 0.0
    %872 = vmatpush.msra.mxu0 %v106
    %873 = vmatpush.msra.mxu0 %v105
    %874 = vmatpush.msra.mxu0 %v104
    %875 = vmatpush.msra.mxu0 %v103
    %876 = vmatmul.f32.gmra.mxu0 %v858
    %v877 = vpop.f32.mrf.mxu0
    %v878 = vadd.f32 0.0, %v877
    %879 = vdwg.mxu0
    %v881 = vsel %vm168, %v856, 0
    %883 = vmatpush.msra.mxu0 0.0
    %884 = vmatpush.msra.mxu0 0.0
    %885 = vmatpush.msra.mxu0 0.0
    %886 = vmatpush.msra.mxu0 0.0
    %887 = vmatpush.msra.mxu0 0.0
    %888 = vmatpush.msra.mxu0 0.0
    %889 = vmatpush.msra.mxu0 0.0
    %890 = vmatpush.msra.mxu0 0.0
    %891 = vmatpush.msra.mxu0 0.0
    %892 = vmatpush.msra.mxu0 0.0
    %893 = vmatpush.msra.mxu0 0.0
    %894 = vmatpush.msra.mxu0 0.0
    %895 = vmatpush.msra.mxu0 0.0
    %896 = vmatpush.msra.mxu0 0.0
    %897 = vmatpush.msra.mxu0 %v93
    %898 = vmatpush.msra.mxu0 %v92
    %899 = vmatmul.f32.gmra.mxu0 %v881
    %v900 = vpop.f32.mrf.mxu0
    %v901 = vadd.f32 %v878, %v900
    %902 = vdwg.mxu0
    %v903 = vadd.f32 %v901, %v124
    %v904 = vxor.u32 %v903, 2147483648
    %v905 = vmul.f32 %v904, 1.442695
    %v906 = vpow.pop %v905
    %v907 = vadd.f32 %v906, 1.0
    %v908 = vrcp.pop %v907
    %v909 = vmul.f32 %v907, %v908
    %v910 = vsub.f32 1.0, %v909
    %v911 = vmul.f32 %v908, %v910
    %v912 = vadd.f32 %v908, %v911
    %vm913 = vweird.f32 %v907
    %vm914 = vweird.f32 %v908
    %vm915 = vmor %vm913, %vm914
    %v916 = vsel %vm915, %v908, %v912
    %v917 = vand.u32 2147483647, %v907
    %vm918 = vcmp.eq.f32.partialorder %v917, 8.507059e+37
    %v919 = vand.u32 %v907, 2147483648
    %v920 = vor.u32 1.1754944e-38, %v919
    %v921 = vsel %vm918, %v920, %v916
    %v922 = vmul.f32 1.0, %v921
    %923 = vmatpush.msra.mxu0 0.0
    %924 = vmatpush.msra.mxu0 0.0
    %925 = vmatpush.msra.mxu0 0.0
    %926 = vmatpush.msra.mxu0 0.0
    %927 = vmatpush.msra.mxu0 0.0
    %928 = vmatpush.msra.mxu0 0.0
    %929 = vmatpush.msra.mxu0 0.0
    %930 = vmatpush.msra.mxu0 0.0
    %931 = vmatpush.msra.mxu0 0.0
    %932 = vmatpush.msra.mxu0 0.0
    %933 = vmatpush.msra.mxu0 0.0
    %934 = vmatpush.msra.mxu0 0.0
    %935 = vmatpush.msra.mxu0 %v111
    %936 = vmatpush.msra.mxu0 %v110
    %937 = vmatpush.msra.mxu0 %v109
    %938 = vmatpush.msra.mxu0 %v108
    %939 = vmatmul.f32.gmra.mxu0 %v858
    %v940 = vpop.f32.mrf.mxu0
    %v941 = vadd.f32 0.0, %v940
    %942 = vdwg.mxu0
    %943 = vmatpush.msra.mxu0 0.0
    %944 = vmatpush.msra.mxu0 0.0
    %945 = vmatpush.msra.mxu0 0.0
    %946 = vmatpush.msra.mxu0 0.0
    %947 = vmatpush.msra.mxu0 0.0
    %948 = vmatpush.msra.mxu0 0.0
    %949 = vmatpush.msra.mxu0 0.0
    %950 = vmatpush.msra.mxu0 0.0
    %951 = vmatpush.msra.mxu0 0.0
    %952 = vmatpush.msra.mxu0 0.0
    %953 = vmatpush.msra.mxu0 0.0
    %954 = vmatpush.msra.mxu0 0.0
    %955 = vmatpush.msra.mxu0 0.0
    %956 = vmatpush.msra.mxu0 0.0
    %957 = vmatpush.msra.mxu0 %v96
    %958 = vmatpush.msra.mxu0 %v95
    %959 = vmatmul.f32.gmra.mxu0 %v881
    %v960 = vpop.f32.mrf.mxu0
    %v961 = vadd.f32 %v941, %v960
    %962 = vdwg.mxu0
    %v963 = vadd.f32 %v961, %v129
    %v964 = vxor.u32 %v963, 2147483648
    %v965 = vmul.f32 %v964, 1.442695
    %v966 = vpow.pop %v965
    %v967 = vadd.f32 %v966, 1.0
    %v968 = vrcp.pop %v967
    %v969 = vmul.f32 %v967, %v968
    %v970 = vsub.f32 1.0, %v969
    %v971 = vmul.f32 %v968, %v970
    %v972 = vadd.f32 %v968, %v971
    %vm973 = vweird.f32 %v967
    %vm974 = vweird.f32 %v968
    %vm975 = vmor %vm973, %vm974
    %v976 = vsel %vm975, %v968, %v972
    %v977 = vand.u32 2147483647, %v967
    %vm978 = vcmp.eq.f32.partialorder %v977, 8.507059e+37
    %v979 = vand.u32 %v967, 2147483648
    %v980 = vor.u32 1.1754944e-38, %v979
    %v981 = vsel %vm978, %v980, %v976
    %v982 = vmul.f32 1.0, %v981
    %983 = vmatpush.msra.mxu0 0.0
    %984 = vmatpush.msra.mxu0 0.0
    %985 = vmatpush.msra.mxu0 0.0
    %986 = vmatpush.msra.mxu0 0.0
    %987 = vmatpush.msra.mxu0 0.0
    %988 = vmatpush.msra.mxu0 0.0
    %989 = vmatpush.msra.mxu0 0.0
    %990 = vmatpush.msra.mxu0 0.0
    %991 = vmatpush.msra.mxu0 0.0
    %992 = vmatpush.msra.mxu0 0.0
    %993 = vmatpush.msra.mxu0 0.0
    %994 = vmatpush.msra.mxu0 0.0
    %995 = vmatpush.msra.mxu0 %v116
    %996 = vmatpush.msra.mxu0 %v115
    %997 = vmatpush.msra.mxu0 %v114
    %998 = vmatpush.msra.mxu0 %v113
    %999 = vmatmul.f32.gmra.mxu0 %v858
    %v1000 = vpop.f32.mrf.mxu0
    %v1001 = vadd.f32 0.0, %v1000
    %1002 = vdwg.mxu0
    %1003 = vmatpush.msra.mxu0 0.0
    %1004 = vmatpush.msra.mxu0 0.0
    %1005 = vmatpush.msra.mxu0 0.0
    %1006 = vmatpush.msra.mxu0 0.0
    %1007 = vmatpush.msra.mxu0 0.0
    %1008 = vmatpush.msra.mxu0 0.0
    %1009 = vmatpush.msra.mxu0 0.0
    %1010 = vmatpush.msra.mxu0 0.0
    %1011 = vmatpush.msra.mxu0 0.0
    %1012 = vmatpush.msra.mxu0 0.0
    %1013 = vmatpush.msra.mxu0 0.0
    %1014 = vmatpush.msra.mxu0 0.0
    %1015 = vmatpush.msra.mxu0 0.0
    %1016 = vmatpush.msra.mxu0 0.0
    %1017 = vmatpush.msra.mxu0 %v99
    %1018 = vmatpush.msra.mxu0 %v98
    %1019 = vmatmul.f32.gmra.mxu0 %v881
    %v1020 = vpop.f32.mrf.mxu0
    %v1021 = vadd.f32 %v1001, %v1020
    %1022 = vdwg.mxu0
    %v1023 = vadd.f32 %v1021, %v134
    %v1024 = vtanh.pop %v1023
    %1025 = vmatpush.msra.mxu0 0.0
    %1026 = vmatpush.msra.mxu0 0.0
    %1027 = vmatpush.msra.mxu0 0.0
    %1028 = vmatpush.msra.mxu0 0.0
    %1029 = vmatpush.msra.mxu0 0.0
    %1030 = vmatpush.msra.mxu0 0.0
    %1031 = vmatpush.msra.mxu0 0.0
    %1032 = vmatpush.msra.mxu0 0.0
    %1033 = vmatpush.msra.mxu0 0.0
    %1034 = vmatpush.msra.mxu0 0.0
    %1035 = vmatpush.msra.mxu0 0.0
    %1036 = vmatpush.msra.mxu0 0.0
    %1037 = vmatpush.msra.mxu0 %v121
    %1038 = vmatpush.msra.mxu0 %v120
    %1039 = vmatpush.msra.mxu0 %v119
    %1040 = vmatpush.msra.mxu0 %v118
    %1041 = vmatmul.f32.gmra.mxu0 %v858
    %v1042 = vpop.f32.mrf.mxu0
    %v1043 = vadd.f32 0.0, %v1042
    %1044 = vdwg.mxu0
    %1045 = vmatpush.msra.mxu0 0.0
    %1046 = vmatpush.msra.mxu0 0.0
    %1047 = vmatpush.msra.mxu0 0.0
    %1048 = vmatpush.msra.mxu0 0.0
    %1049 = vmatpush.msra.mxu0 0.0
    %1050 = vmatpush.msra.mxu0 0.0
    %1051 = vmatpush.msra.mxu0 0.0
    %1052 = vmatpush.msra.mxu0 0.0
    %1053 = vmatpush.msra.mxu0 0.0
    %1054 = vmatpush.msra.mxu0 0.0
    %1055 = vmatpush.msra.mxu0 0.0
    %1056 = vmatpush.msra.mxu0 0.0
    %1057 = vmatpush.msra.mxu0 0.0
    %1058 = vmatpush.msra.mxu0 0.0
    %1059 = vmatpush.msra.mxu0 %v102
    %1060 = vmatpush.msra.mxu0 %v101
    %1061 = vmatmul.f32.gmra.mxu0 %v881
    %v1062 = vpop.f32.mrf.mxu0
    %v1063 = vadd.f32 %v1043, %v1062
    %1064 = vdwg.mxu0
    %v1065 = vadd.f32 %v1063, %v139
    %v1066 = vxor.u32 %v1065, 2147483648
    %v1067 = vmul.f32 %v1066, 1.442695
    %v1068 = vpow.pop %v1067
    %v1069 = vadd.f32 %v1068, 1.0
    %v1070 = vrcp.pop %v1069
    %v1071 = vmul.f32 %v1069, %v1070
    %v1072 = vsub.f32 1.0, %v1071
    %v1073 = vmul.f32 %v1070, %v1072
    %v1074 = vadd.f32 %v1070, %v1073
    %vm1075 = vweird.f32 %v1069
    %vm1076 = vweird.f32 %v1070
    %vm1077 = vmor %vm1075, %vm1076
    %v1078 = vsel %vm1077, %v1070, %v1074
    %v1079 = vand.u32 2147483647, %v1069
    %vm1080 = vcmp.eq.f32.partialorder %v1079, 8.507059e+37
    %v1081 = vand.u32 %v1069, 2147483648
    %v1082 = vor.u32 1.1754944e-38, %v1081
    %v1083 = vsel %vm1080, %v1082, %v1078
    %v1084 = vmul.f32 1.0, %v1083
    %v1085 = vmul.f32 %v982, %v850
    %v1086 = vmul.f32 %v922, %v1024
    %v1087 = vadd.f32 %v1085, %v1086
    %v1088 = vtanh.pop %v1087
    %v1089 = vmul.f32 %v1084, %v1088
    %s1090 = scalar_lea.vmem [#allocation12], 6
    %1091 = vst.msk [vmem:[%s1090] sm:$0x3] %vm379, %v1089
    %s1092 = scalar_lea.vmem [#allocation4], 8
    %v1093 = vld [vmem:[%s1092] sm:$0x3]
    %v1095 = vsel %vm144, %v1089, 0
    %1097 = vmatpush.msra.mxu0 0.0
    %1098 = vmatpush.msra.mxu0 0.0
    %1099 = vmatpush.msra.mxu0 0.0
    %1100 = vmatpush.msra.mxu0 0.0
    %1101 = vmatpush.msra.mxu0 0.0
    %1102 = vmatpush.msra.mxu0 0.0
    %1103 = vmatpush.msra.mxu0 0.0
    %1104 = vmatpush.msra.mxu0 0.0
    %1105 = vmatpush.msra.mxu0 0.0
    %1106 = vmatpush.msra.mxu0 0.0
    %1107 = vmatpush.msra.mxu0 0.0
    %1108 = vmatpush.msra.mxu0 0.0
    %1109 = vmatpush.msra.mxu0 %v106
    %1110 = vmatpush.msra.mxu0 %v105
    %1111 = vmatpush.msra.mxu0 %v104
    %1112 = vmatpush.msra.mxu0 %v103
    %1113 = vmatmul.f32.gmra.mxu0 %v1095
    %v1114 = vpop.f32.mrf.mxu0
    %v1115 = vadd.f32 0.0, %v1114
    %1116 = vdwg.mxu0
    %v1118 = vsel %vm168, %v1093, 0
    %1120 = vmatpush.msra.mxu0 0.0
    %1121 = vmatpush.msra.mxu0 0.0
    %1122 = vmatpush.msra.mxu0 0.0
    %1123 = vmatpush.msra.mxu0 0.0
    %1124 = vmatpush.msra.mxu0 0.0
    %1125 = vmatpush.msra.mxu0 0.0
    %1126 = vmatpush.msra.mxu0 0.0
    %1127 = vmatpush.msra.mxu0 0.0
    %1128 = vmatpush.msra.mxu0 0.0
    %1129 = vmatpush.msra.mxu0 0.0
    %1130 = vmatpush.msra.mxu0 0.0
    %1131 = vmatpush.msra.mxu0 0.0
    %1132 = vmatpush.msra.mxu0 0.0
    %1133 = vmatpush.msra.mxu0 0.0
    %1134 = vmatpush.msra.mxu0 %v93
    %1135 = vmatpush.msra.mxu0 %v92
    %1136 = vmatmul.f32.gmra.mxu0 %v1118
    %v1137 = vpop.f32.mrf.mxu0
    %v1138 = vadd.f32 %v1115, %v1137
    %1139 = vdwg.mxu0
    %v1140 = vadd.f32 %v1138, %v124
    %v1141 = vxor.u32 %v1140, 2147483648
    %v1142 = vmul.f32 %v1141, 1.442695
    %v1143 = vpow.pop %v1142
    %v1144 = vadd.f32 %v1143, 1.0
    %v1145 = vrcp.pop %v1144
    %v1146 = vmul.f32 %v1144, %v1145
    %v1147 = vsub.f32 1.0, %v1146
    %v1148 = vmul.f32 %v1145, %v1147
    %v1149 = vadd.f32 %v1145, %v1148
    %vm1150 = vweird.f32 %v1144
    %vm1151 = vweird.f32 %v1145
    %vm1152 = vmor %vm1150, %vm1151
    %v1153 = vsel %vm1152, %v1145, %v1149
    %v1154 = vand.u32 2147483647, %v1144
    %vm1155 = vcmp.eq.f32.partialorder %v1154, 8.507059e+37
    %v1156 = vand.u32 %v1144, 2147483648
    %v1157 = vor.u32 1.1754944e-38, %v1156
    %v1158 = vsel %vm1155, %v1157, %v1153
    %v1159 = vmul.f32 1.0, %v1158
    %1160 = vmatpush.msra.mxu0 0.0
    %1161 = vmatpush.msra.mxu0 0.0
    %1162 = vmatpush.msra.mxu0 0.0
    %1163 = vmatpush.msra.mxu0 0.0
    %1164 = vmatpush.msra.mxu0 0.0
    %1165 = vmatpush.msra.mxu0 0.0
    %1166 = vmatpush.msra.mxu0 0.0
    %1167 = vmatpush.msra.mxu0 0.0
    %1168 = vmatpush.msra.mxu0 0.0
    %1169 = vmatpush.msra.mxu0 0.0
    %1170 = vmatpush.msra.mxu0 0.0
    %1171 = vmatpush.msra.mxu0 0.0
    %1172 = vmatpush.msra.mxu0 %v111
    %1173 = vmatpush.msra.mxu0 %v110
    %1174 = vmatpush.msra.mxu0 %v109
    %1175 = vmatpush.msra.mxu0 %v108
    %1176 = vmatmul.f32.gmra.mxu0 %v1095
    %v1177 = vpop.f32.mrf.mxu0
    %v1178 = vadd.f32 0.0, %v1177
    %1179 = vdwg.mxu0
    %1180 = vmatpush.msra.mxu0 0.0
    %1181 = vmatpush.msra.mxu0 0.0
    %1182 = vmatpush.msra.mxu0 0.0
    %1183 = vmatpush.msra.mxu0 0.0
    %1184 = vmatpush.msra.mxu0 0.0
    %1185 = vmatpush.msra.mxu0 0.0
    %1186 = vmatpush.msra.mxu0 0.0
    %1187 = vmatpush.msra.mxu0 0.0
    %1188 = vmatpush.msra.mxu0 0.0
    %1189 = vmatpush.msra.mxu0 0.0
    %1190 = vmatpush.msra.mxu0 0.0
    %1191 = vmatpush.msra.mxu0 0.0
    %1192 = vmatpush.msra.mxu0 0.0
    %1193 = vmatpush.msra.mxu0 0.0
    %1194 = vmatpush.msra.mxu0 %v96
    %1195 = vmatpush.msra.mxu0 %v95
    %1196 = vmatmul.f32.gmra.mxu0 %v1118
    %v1197 = vpop.f32.mrf.mxu0
    %v1198 = vadd.f32 %v1178, %v1197
    %1199 = vdwg.mxu0
    %v1200 = vadd.f32 %v1198, %v129
    %v1201 = vxor.u32 %v1200, 2147483648
    %v1202 = vmul.f32 %v1201, 1.442695
    %v1203 = vpow.pop %v1202
    %v1204 = vadd.f32 %v1203, 1.0
    %v1205 = vrcp.pop %v1204
    %v1206 = vmul.f32 %v1204, %v1205
    %v1207 = vsub.f32 1.0, %v1206
    %v1208 = vmul.f32 %v1205, %v1207
    %v1209 = vadd.f32 %v1205, %v1208
    %vm1210 = vweird.f32 %v1204
    %vm1211 = vweird.f32 %v1205
    %vm1212 = vmor %vm1210, %vm1211
    %v1213 = vsel %vm1212, %v1205, %v1209
    %v1214 = vand.u32 2147483647, %v1204
    %vm1215 = vcmp.eq.f32.partialorder %v1214, 8.507059e+37
    %v1216 = vand.u32 %v1204, 2147483648
    %v1217 = vor.u32 1.1754944e-38, %v1216
    %v1218 = vsel %vm1215, %v1217, %v1213
    %v1219 = vmul.f32 1.0, %v1218
    %1220 = vmatpush.msra.mxu0 0.0
    %1221 = vmatpush.msra.mxu0 0.0
    %1222 = vmatpush.msra.mxu0 0.0
    %1223 = vmatpush.msra.mxu0 0.0
    %1224 = vmatpush.msra.mxu0 0.0
    %1225 = vmatpush.msra.mxu0 0.0
    %1226 = vmatpush.msra.mxu0 0.0
    %1227 = vmatpush.msra.mxu0 0.0
    %1228 = vmatpush.msra.mxu0 0.0
    %1229 = vmatpush.msra.mxu0 0.0
    %1230 = vmatpush.msra.mxu0 0.0
    %1231 = vmatpush.msra.mxu0 0.0
    %1232 = vmatpush.msra.mxu0 %v116
    %1233 = vmatpush.msra.mxu0 %v115
    %1234 = vmatpush.msra.mxu0 %v114
    %1235 = vmatpush.msra.mxu0 %v113
    %1236 = vmatmul.f32.gmra.mxu0 %v1095
    %v1237 = vpop.f32.mrf.mxu0
    %v1238 = vadd.f32 0.0, %v1237
    %1239 = vdwg.mxu0
    %1240 = vmatpush.msra.mxu0 0.0
    %1241 = vmatpush.msra.mxu0 0.0
    %1242 = vmatpush.msra.mxu0 0.0
    %1243 = vmatpush.msra.mxu0 0.0
    %1244 = vmatpush.msra.mxu0 0.0
    %1245 = vmatpush.msra.mxu0 0.0
    %1246 = vmatpush.msra.mxu0 0.0
    %1247 = vmatpush.msra.mxu0 0.0
    %1248 = vmatpush.msra.mxu0 0.0
    %1249 = vmatpush.msra.mxu0 0.0
    %1250 = vmatpush.msra.mxu0 0.0
    %1251 = vmatpush.msra.mxu0 0.0
    %1252 = vmatpush.msra.mxu0 0.0
    %1253 = vmatpush.msra.mxu0 0.0
    %1254 = vmatpush.msra.mxu0 %v99
    %1255 = vmatpush.msra.mxu0 %v98
    %1256 = vmatmul.f32.gmra.mxu0 %v1118
    %v1257 = vpop.f32.mrf.mxu0
    %v1258 = vadd.f32 %v1238, %v1257
    %1259 = vdwg.mxu0
    %v1260 = vadd.f32 %v1258, %v134
    %v1261 = vtanh.pop %v1260
    %1262 = vmatpush.msra.mxu0 0.0
    %1263 = vmatpush.msra.mxu0 0.0
    %1264 = vmatpush.msra.mxu0 0.0
    %1265 = vmatpush.msra.mxu0 0.0
    %1266 = vmatpush.msra.mxu0 0.0
    %1267 = vmatpush.msra.mxu0 0.0
    %1268 = vmatpush.msra.mxu0 0.0
    %1269 = vmatpush.msra.mxu0 0.0
    %1270 = vmatpush.msra.mxu0 0.0
    %1271 = vmatpush.msra.mxu0 0.0
    %1272 = vmatpush.msra.mxu0 0.0
    %1273 = vmatpush.msra.mxu0 0.0
    %1274 = vmatpush.msra.mxu0 %v121
    %1275 = vmatpush.msra.mxu0 %v120
    %1276 = vmatpush.msra.mxu0 %v119
    %1277 = vmatpush.msra.mxu0 %v118
    %1278 = vmatmul.f32.gmra.mxu0 %v1095
    %v1279 = vpop.f32.mrf.mxu0
    %v1280 = vadd.f32 0.0, %v1279
    %1281 = vdwg.mxu0
    %1282 = vmatpush.msra.mxu0 0.0
    %1283 = vmatpush.msra.mxu0 0.0
    %1284 = vmatpush.msra.mxu0 0.0
    %1285 = vmatpush.msra.mxu0 0.0
    %1286 = vmatpush.msra.mxu0 0.0
    %1287 = vmatpush.msra.mxu0 0.0
    %1288 = vmatpush.msra.mxu0 0.0
    %1289 = vmatpush.msra.mxu0 0.0
    %1290 = vmatpush.msra.mxu0 0.0
    %1291 = vmatpush.msra.mxu0 0.0
    %1292 = vmatpush.msra.mxu0 0.0
    %1293 = vmatpush.msra.mxu0 0.0
    %1294 = vmatpush.msra.mxu0 0.0
    %1295 = vmatpush.msra.mxu0 0.0
    %1296 = vmatpush.msra.mxu0 %v102
    %1297 = vmatpush.msra.mxu0 %v101
    %1298 = vmatmul.f32.gmra.mxu0 %v1118
    %v1299 = vpop.f32.mrf.mxu0
    %v1300 = vadd.f32 %v1280, %v1299
    %1301 = vdwg.mxu0
    %v1302 = vadd.f32 %v1300, %v139
    %v1303 = vxor.u32 %v1302, 2147483648
    %v1304 = vmul.f32 %v1303, 1.442695
    %v1305 = vpow.pop %v1304
    %v1306 = vadd.f32 %v1305, 1.0
    %v1307 = vrcp.pop %v1306
    %v1308 = vmul.f32 %v1306, %v1307
    %v1309 = vsub.f32 1.0, %v1308
    %v1310 = vmul.f32 %v1307, %v1309
    %v1311 = vadd.f32 %v1307, %v1310
    %vm1312 = vweird.f32 %v1306
    %vm1313 = vweird.f32 %v1307
    %vm1314 = vmor %vm1312, %vm1313
    %v1315 = vsel %vm1314, %v1307, %v1311
    %v1316 = vand.u32 2147483647, %v1306
    %vm1317 = vcmp.eq.f32.partialorder %v1316, 8.507059e+37
    %v1318 = vand.u32 %v1306, 2147483648
    %v1319 = vor.u32 1.1754944e-38, %v1318
    %v1320 = vsel %vm1317, %v1319, %v1315
    %v1321 = vmul.f32 1.0, %v1320
    %v1322 = vmul.f32 %v1219, %v1087
    %v1323 = vmul.f32 %v1159, %v1261
    %v1324 = vadd.f32 %v1322, %v1323
    %v1325 = vtanh.pop %v1324
    %v1326 = vmul.f32 %v1321, %v1325
    %s1327 = scalar_lea.vmem [#allocation12], 8
    %1328 = vst.msk [vmem:[%s1327] sm:$0x3] %vm379, %v1326
    %s1329 = scalar_lea.vmem [#allocation4], 10
    %v1330 = vld [vmem:[%s1329] sm:$0x3]
    %v1332 = vsel %vm144, %v1326, 0
    %1334 = vmatpush.msra.mxu0 0.0
    %1335 = vmatpush.msra.mxu0 0.0
    %1336 = vmatpush.msra.mxu0 0.0
    %1337 = vmatpush.msra.mxu0 0.0
    %1338 = vmatpush.msra.mxu0 0.0
    %1339 = vmatpush.msra.mxu0 0.0
    %1340 = vmatpush.msra.mxu0 0.0
    %1341 = vmatpush.msra.mxu0 0.0
    %1342 = vmatpush.msra.mxu0 0.0
    %1343 = vmatpush.msra.mxu0 0.0
    %1344 = vmatpush.msra.mxu0 0.0
    %1345 = vmatpush.msra.mxu0 0.0
    %1346 = vmatpush.msra.mxu0 %v106
    %1347 = vmatpush.msra.mxu0 %v105
    %1348 = vmatpush.msra.mxu0 %v104
    %1349 = vmatpush.msra.mxu0 %v103
    %1350 = vmatmul.f32.gmra.mxu0 %v1332
    %v1351 = vpop.f32.mrf.mxu0
    %v1352 = vadd.f32 0.0, %v1351
    %1353 = vdwg.mxu0
    %v1355 = vsel %vm168, %v1330, 0
    %1357 = vmatpush.msra.mxu0 0.0
    %1358 = vmatpush.msra.mxu0 0.0
    %1359 = vmatpush.msra.mxu0 0.0
    %1360 = vmatpush.msra.mxu0 0.0
    %1361 = vmatpush.msra.mxu0 0.0
    %1362 = vmatpush.msra.mxu0 0.0
    %1363 = vmatpush.msra.mxu0 0.0
    %1364 = vmatpush.msra.mxu0 0.0
    %1365 = vmatpush.msra.mxu0 0.0
    %1366 = vmatpush.msra.mxu0 0.0
    %1367 = vmatpush.msra.mxu0 0.0
    %1368 = vmatpush.msra.mxu0 0.0
    %1369 = vmatpush.msra.mxu0 0.0
    %1370 = vmatpush.msra.mxu0 0.0
    %1371 = vmatpush.msra.mxu0 %v93
    %1372 = vmatpush.msra.mxu0 %v92
    %1373 = vmatmul.f32.gmra.mxu0 %v1355
    %v1374 = vpop.f32.mrf.mxu0
    %v1375 = vadd.f32 %v1352, %v1374
    %1376 = vdwg.mxu0
    %v1377 = vadd.f32 %v1375, %v124
    %v1378 = vxor.u32 %v1377, 2147483648
    %v1379 = vmul.f32 %v1378, 1.442695
    %v1380 = vpow.pop %v1379
    %v1381 = vadd.f32 %v1380, 1.0
    %v1382 = vrcp.pop %v1381
    %v1383 = vmul.f32 %v1381, %v1382
    %v1384 = vsub.f32 1.0, %v1383
    %v1385 = vmul.f32 %v1382, %v1384
    %v1386 = vadd.f32 %v1382, %v1385
    %vm1387 = vweird.f32 %v1381
    %vm1388 = vweird.f32 %v1382
    %vm1389 = vmor %vm1387, %vm1388
    %v1390 = vsel %vm1389, %v1382, %v1386
    %v1391 = vand.u32 2147483647, %v1381
    %vm1392 = vcmp.eq.f32.partialorder %v1391, 8.507059e+37
    %v1393 = vand.u32 %v1381, 2147483648
    %v1394 = vor.u32 1.1754944e-38, %v1393
    %v1395 = vsel %vm1392, %v1394, %v1390
    %v1396 = vmul.f32 1.0, %v1395
    %1397 = vmatpush.msra.mxu0 0.0
    %1398 = vmatpush.msra.mxu0 0.0
    %1399 = vmatpush.msra.mxu0 0.0
    %1400 = vmatpush.msra.mxu0 0.0
    %1401 = vmatpush.msra.mxu0 0.0
    %1402 = vmatpush.msra.mxu0 0.0
    %1403 = vmatpush.msra.mxu0 0.0
    %1404 = vmatpush.msra.mxu0 0.0
    %1405 = vmatpush.msra.mxu0 0.0
    %1406 = vmatpush.msra.mxu0 0.0
    %1407 = vmatpush.msra.mxu0 0.0
    %1408 = vmatpush.msra.mxu0 0.0
    %1409 = vmatpush.msra.mxu0 %v111
    %1410 = vmatpush.msra.mxu0 %v110
    %1411 = vmatpush.msra.mxu0 %v109
    %1412 = vmatpush.msra.mxu0 %v108
    %1413 = vmatmul.f32.gmra.mxu0 %v1332
    %v1414 = vpop.f32.mrf.mxu0
    %v1415 = vadd.f32 0.0, %v1414
    %1416 = vdwg.mxu0
    %1417 = vmatpush.msra.mxu0 0.0
    %1418 = vmatpush.msra.mxu0 0.0
    %1419 = vmatpush.msra.mxu0 0.0
    %1420 = vmatpush.msra.mxu0 0.0
    %1421 = vmatpush.msra.mxu0 0.0
    %1422 = vmatpush.msra.mxu0 0.0
    %1423 = vmatpush.msra.mxu0 0.0
    %1424 = vmatpush.msra.mxu0 0.0
    %1425 = vmatpush.msra.mxu0 0.0
    %1426 = vmatpush.msra.mxu0 0.0
    %1427 = vmatpush.msra.mxu0 0.0
    %1428 = vmatpush.msra.mxu0 0.0
    %1429 = vmatpush.msra.mxu0 0.0
    %1430 = vmatpush.msra.mxu0 0.0
    %1431 = vmatpush.msra.mxu0 %v96
    %1432 = vmatpush.msra.mxu0 %v95
    %1433 = vmatmul.f32.gmra.mxu0 %v1355
    %v1434 = vpop.f32.mrf.mxu0
    %v1435 = vadd.f32 %v1415, %v1434
    %1436 = vdwg.mxu0
    %v1437 = vadd.f32 %v1435, %v129
    %v1438 = vxor.u32 %v1437, 2147483648
    %v1439 = vmul.f32 %v1438, 1.442695
    %v1440 = vpow.pop %v1439
    %v1441 = vadd.f32 %v1440, 1.0
    %v1442 = vrcp.pop %v1441
    %v1443 = vmul.f32 %v1441, %v1442
    %v1444 = vsub.f32 1.0, %v1443
    %v1445 = vmul.f32 %v1442, %v1444
    %v1446 = vadd.f32 %v1442, %v1445
    %vm1447 = vweird.f32 %v1441
    %vm1448 = vweird.f32 %v1442
    %vm1449 = vmor %vm1447, %vm1448
    %v1450 = vsel %vm1449, %v1442, %v1446
    %v1451 = vand.u32 2147483647, %v1441
    %vm1452 = vcmp.eq.f32.partialorder %v1451, 8.507059e+37
    %v1453 = vand.u32 %v1441, 2147483648
    %v1454 = vor.u32 1.1754944e-38, %v1453
    %v1455 = vsel %vm1452, %v1454, %v1450
    %v1456 = vmul.f32 1.0, %v1455
    %1457 = vmatpush.msra.mxu0 0.0
    %1458 = vmatpush.msra.mxu0 0.0
    %1459 = vmatpush.msra.mxu0 0.0
    %1460 = vmatpush.msra.mxu0 0.0
    %1461 = vmatpush.msra.mxu0 0.0
    %1462 = vmatpush.msra.mxu0 0.0
    %1463 = vmatpush.msra.mxu0 0.0
    %1464 = vmatpush.msra.mxu0 0.0
    %1465 = vmatpush.msra.mxu0 0.0
    %1466 = vmatpush.msra.mxu0 0.0
    %1467 = vmatpush.msra.mxu0 0.0
    %1468 = vmatpush.msra.mxu0 0.0
    %1469 = vmatpush.msra.mxu0 %v116
    %1470 = vmatpush.msra.mxu0 %v115
    %1471 = vmatpush.msra.mxu0 %v114
    %1472 = vmatpush.msra.mxu0 %v113
    %1473 = vmatmul.f32.gmra.mxu0 %v1332
    %v1474 = vpop.f32.mrf.mxu0
    %v1475 = vadd.f32 0.0, %v1474
    %1476 = vdwg.mxu0
    %1477 = vmatpush.msra.mxu0 0.0
    %1478 = vmatpush.msra.mxu0 0.0
    %1479 = vmatpush.msra.mxu0 0.0
    %1480 = vmatpush.msra.mxu0 0.0
    %1481 = vmatpush.msra.mxu0 0.0
    %1482 = vmatpush.msra.mxu0 0.0
    %1483 = vmatpush.msra.mxu0 0.0
    %1484 = vmatpush.msra.mxu0 0.0
    %1485 = vmatpush.msra.mxu0 0.0
    %1486 = vmatpush.msra.mxu0 0.0
    %1487 = vmatpush.msra.mxu0 0.0
    %1488 = vmatpush.msra.mxu0 0.0
    %1489 = vmatpush.msra.mxu0 0.0
    %1490 = vmatpush.msra.mxu0 0.0
    %1491 = vmatpush.msra.mxu0 %v99
    %1492 = vmatpush.msra.mxu0 %v98
    %1493 = vmatmul.f32.gmra.mxu0 %v1355
    %v1494 = vpop.f32.mrf.mxu0
    %v1495 = vadd.f32 %v1475, %v1494
    %1496 = vdwg.mxu0
    %v1497 = vadd.f32 %v1495, %v134
    %v1498 = vtanh.pop %v1497
    %1499 = vmatpush.msra.mxu0 0.0
    %1500 = vmatpush.msra.mxu0 0.0
    %1501 = vmatpush.msra.mxu0 0.0
    %1502 = vmatpush.msra.mxu0 0.0
    %1503 = vmatpush.msra.mxu0 0.0
    %1504 = vmatpush.msra.mxu0 0.0
    %1505 = vmatpush.msra.mxu0 0.0
    %1506 = vmatpush.msra.mxu0 0.0
    %1507 = vmatpush.msra.mxu0 0.0
    %1508 = vmatpush.msra.mxu0 0.0
    %1509 = vmatpush.msra.mxu0 0.0
    %1510 = vmatpush.msra.mxu0 0.0
    %1511 = vmatpush.msra.mxu0 %v121
    %1512 = vmatpush.msra.mxu0 %v120
    %1513 = vmatpush.msra.mxu0 %v119
    %1514 = vmatpush.msra.mxu0 %v118
    %1515 = vmatmul.f32.gmra.mxu0 %v1332
    %v1516 = vpop.f32.mrf.mxu0
    %v1517 = vadd.f32 0.0, %v1516
    %1518 = vdwg.mxu0
    %1519 = vmatpush.msra.mxu0 0.0
    %1520 = vmatpush.msra.mxu0 0.0
    %1521 = vmatpush.msra.mxu0 0.0
    %1522 = vmatpush.msra.mxu0 0.0
    %1523 = vmatpush.msra.mxu0 0.0
    %1524 = vmatpush.msra.mxu0 0.0
    %1525 = vmatpush.msra.mxu0 0.0
    %1526 = vmatpush.msra.mxu0 0.0
    %1527 = vmatpush.msra.mxu0 0.0
    %1528 = vmatpush.msra.mxu0 0.0
    %1529 = vmatpush.msra.mxu0 0.0
    %1530 = vmatpush.msra.mxu0 0.0
    %1531 = vmatpush.msra.mxu0 0.0
    %1532 = vmatpush.msra.mxu0 0.0
    %1533 = vmatpush.msra.mxu0 %v102
    %1534 = vmatpush.msra.mxu0 %v101
    %1535 = vmatmul.f32.gmra.mxu0 %v1355
    %v1536 = vpop.f32.mrf.mxu0
    %v1537 = vadd.f32 %v1517, %v1536
    %1538 = vdwg.mxu0
    %v1539 = vadd.f32 %v1537, %v139
    %v1540 = vxor.u32 %v1539, 2147483648
    %v1541 = vmul.f32 %v1540, 1.442695
    %v1542 = vpow.pop %v1541
    %v1543 = vadd.f32 %v1542, 1.0
    %v1544 = vrcp.pop %v1543
    %v1545 = vmul.f32 %v1543, %v1544
    %v1546 = vsub.f32 1.0, %v1545
    %v1547 = vmul.f32 %v1544, %v1546
    %v1548 = vadd.f32 %v1544, %v1547
    %vm1549 = vweird.f32 %v1543
    %vm1550 = vweird.f32 %v1544
    %vm1551 = vmor %vm1549, %vm1550
    %v1552 = vsel %vm1551, %v1544, %v1548
    %v1553 = vand.u32 2147483647, %v1543
    %vm1554 = vcmp.eq.f32.partialorder %v1553, 8.507059e+37
    %v1555 = vand.u32 %v1543, 2147483648
    %v1556 = vor.u32 1.1754944e-38, %v1555
    %v1557 = vsel %vm1554, %v1556, %v1552
    %v1558 = vmul.f32 1.0, %v1557
    %v1559 = vmul.f32 %v1456, %v1324
    %v1560 = vmul.f32 %v1396, %v1498
    %v1561 = vadd.f32 %v1559, %v1560
    %v1562 = vtanh.pop %v1561
    %v1563 = vmul.f32 %v1558, %v1562
    %s1564 = scalar_lea.vmem [#allocation12], 10
    %1565 = vst.msk [vmem:[%s1564] sm:$0x3] %vm379, %v1563
    %s1566 = scalar_lea.vmem [#allocation4], 12
    %v1567 = vld [vmem:[%s1566] sm:$0x3]
    %v1569 = vsel %vm144, %v1563, 0
    %1571 = vmatpush.msra.mxu0 0.0
    %1572 = vmatpush.msra.mxu0 0.0
    %1573 = vmatpush.msra.mxu0 0.0
    %1574 = vmatpush.msra.mxu0 0.0
    %1575 = vmatpush.msra.mxu0 0.0
    %1576 = vmatpush.msra.mxu0 0.0
    %1577 = vmatpush.msra.mxu0 0.0
    %1578 = vmatpush.msra.mxu0 0.0
    %1579 = vmatpush.msra.mxu0 0.0
    %1580 = vmatpush.msra.mxu0 0.0
    %1581 = vmatpush.msra.mxu0 0.0
    %1582 = vmatpush.msra.mxu0 0.0
    %1583 = vmatpush.msra.mxu0 %v106
    %1584 = vmatpush.msra.mxu0 %v105
    %1585 = vmatpush.msra.mxu0 %v104
    %1586 = vmatpush.msra.mxu0 %v103
    %1587 = vmatmul.f32.gmra.mxu0 %v1569
    %v1588 = vpop.f32.mrf.mxu0
    %v1589 = vadd.f32 0.0, %v1588
    %1590 = vdwg.mxu0
    %v1592 = vsel %vm168, %v1567, 0
    %1594 = vmatpush.msra.mxu0 0.0
    %1595 = vmatpush.msra.mxu0 0.0
    %1596 = vmatpush.msra.mxu0 0.0
    %1597 = vmatpush.msra.mxu0 0.0
    %1598 = vmatpush.msra.mxu0 0.0
    %1599 = vmatpush.msra.mxu0 0.0
    %1600 = vmatpush.msra.mxu0 0.0
    %1601 = vmatpush.msra.mxu0 0.0
    %1602 = vmatpush.msra.mxu0 0.0
    %1603 = vmatpush.msra.mxu0 0.0
    %1604 = vmatpush.msra.mxu0 0.0
    %1605 = vmatpush.msra.mxu0 0.0
    %1606 = vmatpush.msra.mxu0 0.0
    %1607 = vmatpush.msra.mxu0 0.0
    %1608 = vmatpush.msra.mxu0 %v93
    %1609 = vmatpush.msra.mxu0 %v92
    %1610 = vmatmul.f32.gmra.mxu0 %v1592
    %v1611 = vpop.f32.mrf.mxu0
    %v1612 = vadd.f32 %v1589, %v1611
    %1613 = vdwg.mxu0
    %v1614 = vadd.f32 %v1612, %v124
    %v1615 = vxor.u32 %v1614, 2147483648
    %v1616 = vmul.f32 %v1615, 1.442695
    %v1617 = vpow.pop %v1616
    %v1618 = vadd.f32 %v1617, 1.0
    %v1619 = vrcp.pop %v1618
    %v1620 = vmul.f32 %v1618, %v1619
    %v1621 = vsub.f32 1.0, %v1620
    %v1622 = vmul.f32 %v1619, %v1621
    %v1623 = vadd.f32 %v1619, %v1622
    %vm1624 = vweird.f32 %v1618
    %vm1625 = vweird.f32 %v1619
    %vm1626 = vmor %vm1624, %vm1625
    %v1627 = vsel %vm1626, %v1619, %v1623
    %v1628 = vand.u32 2147483647, %v1618
    %vm1629 = vcmp.eq.f32.partialorder %v1628, 8.507059e+37
    %v1630 = vand.u32 %v1618, 2147483648
    %v1631 = vor.u32 1.1754944e-38, %v1630
    %v1632 = vsel %vm1629, %v1631, %v1627
    %v1633 = vmul.f32 1.0, %v1632
    %1634 = vmatpush.msra.mxu0 0.0
    %1635 = vmatpush.msra.mxu0 0.0
    %1636 = vmatpush.msra.mxu0 0.0
    %1637 = vmatpush.msra.mxu0 0.0
    %1638 = vmatpush.msra.mxu0 0.0
    %1639 = vmatpush.msra.mxu0 0.0
    %1640 = vmatpush.msra.mxu0 0.0
    %1641 = vmatpush.msra.mxu0 0.0
    %1642 = vmatpush.msra.mxu0 0.0
    %1643 = vmatpush.msra.mxu0 0.0
    %1644 = vmatpush.msra.mxu0 0.0
    %1645 = vmatpush.msra.mxu0 0.0
    %1646 = vmatpush.msra.mxu0 %v111
    %1647 = vmatpush.msra.mxu0 %v110
    %1648 = vmatpush.msra.mxu0 %v109
    %1649 = vmatpush.msra.mxu0 %v108
    %1650 = vmatmul.f32.gmra.mxu0 %v1569
    %v1651 = vpop.f32.mrf.mxu0
    %v1652 = vadd.f32 0.0, %v1651
    %1653 = vdwg.mxu0
    %1654 = vmatpush.msra.mxu0 0.0
    %1655 = vmatpush.msra.mxu0 0.0
    %1656 = vmatpush.msra.mxu0 0.0
    %1657 = vmatpush.msra.mxu0 0.0
    %1658 = vmatpush.msra.mxu0 0.0
    %1659 = vmatpush.msra.mxu0 0.0
    %1660 = vmatpush.msra.mxu0 0.0
    %1661 = vmatpush.msra.mxu0 0.0
    %1662 = vmatpush.msra.mxu0 0.0
    %1663 = vmatpush.msra.mxu0 0.0
    %1664 = vmatpush.msra.mxu0 0.0
    %1665 = vmatpush.msra.mxu0 0.0
    %1666 = vmatpush.msra.mxu0 0.0
    %1667 = vmatpush.msra.mxu0 0.0
    %1668 = vmatpush.msra.mxu0 %v96
    %1669 = vmatpush.msra.mxu0 %v95
    %1670 = vmatmul.f32.gmra.mxu0 %v1592
    %v1671 = vpop.f32.mrf.mxu0
    %v1672 = vadd.f32 %v1652, %v1671
    %1673 = vdwg.mxu0
    %v1674 = vadd.f32 %v1672, %v129
    %v1675 = vxor.u32 %v1674, 2147483648
    %v1676 = vmul.f32 %v1675, 1.442695
    %v1677 = vpow.pop %v1676
    %v1678 = vadd.f32 %v1677, 1.0
    %v1679 = vrcp.pop %v1678
    %v1680 = vmul.f32 %v1678, %v1679
    %v1681 = vsub.f32 1.0, %v1680
    %v1682 = vmul.f32 %v1679, %v1681
    %v1683 = vadd.f32 %v1679, %v1682
    %vm1684 = vweird.f32 %v1678
    %vm1685 = vweird.f32 %v1679
    %vm1686 = vmor %vm1684, %vm1685
    %v1687 = vsel %vm1686, %v1679, %v1683
    %v1688 = vand.u32 2147483647, %v1678
    %vm1689 = vcmp.eq.f32.partialorder %v1688, 8.507059e+37
    %v1690 = vand.u32 %v1678, 2147483648
    %v1691 = vor.u32 1.1754944e-38, %v1690
    %v1692 = vsel %vm1689, %v1691, %v1687
    %v1693 = vmul.f32 1.0, %v1692
    %1694 = vmatpush.msra.mxu0 0.0
    %1695 = vmatpush.msra.mxu0 0.0
    %1696 = vmatpush.msra.mxu0 0.0
    %1697 = vmatpush.msra.mxu0 0.0
    %1698 = vmatpush.msra.mxu0 0.0
    %1699 = vmatpush.msra.mxu0 0.0
    %1700 = vmatpush.msra.mxu0 0.0
    %1701 = vmatpush.msra.mxu0 0.0
    %1702 = vmatpush.msra.mxu0 0.0
    %1703 = vmatpush.msra.mxu0 0.0
    %1704 = vmatpush.msra.mxu0 0.0
    %1705 = vmatpush.msra.mxu0 0.0
    %1706 = vmatpush.msra.mxu0 %v116
    %1707 = vmatpush.msra.mxu0 %v115
    %1708 = vmatpush.msra.mxu0 %v114
    %1709 = vmatpush.msra.mxu0 %v113
    %1710 = vmatmul.f32.gmra.mxu0 %v1569
    %v1711 = vpop.f32.mrf.mxu0
    %v1712 = vadd.f32 0.0, %v1711
    %1713 = vdwg.mxu0
    %1714 = vmatpush.msra.mxu0 0.0
    %1715 = vmatpush.msra.mxu0 0.0
    %1716 = vmatpush.msra.mxu0 0.0
    %1717 = vmatpush.msra.mxu0 0.0
    %1718 = vmatpush.msra.mxu0 0.0
    %1719 = vmatpush.msra.mxu0 0.0
    %1720 = vmatpush.msra.mxu0 0.0
    %1721 = vmatpush.msra.mxu0 0.0
    %1722 = vmatpush.msra.mxu0 0.0
    %1723 = vmatpush.msra.mxu0 0.0
    %1724 = vmatpush.msra.mxu0 0.0
    %1725 = vmatpush.msra.mxu0 0.0
    %1726 = vmatpush.msra.mxu0 0.0
    %1727 = vmatpush.msra.mxu0 0.0
    %1728 = vmatpush.msra.mxu0 %v99
    %1729 = vmatpush.msra.mxu0 %v98
    %1730 = vmatmul.f32.gmra.mxu0 %v1592
    %v1731 = vpop.f32.mrf.mxu0
    %v1732 = vadd.f32 %v1712, %v1731
    %1733 = vdwg.mxu0
    %v1734 = vadd.f32 %v1732, %v134
    %v1735 = vtanh.pop %v1734
    %1736 = vmatpush.msra.mxu0 0.0
    %1737 = vmatpush.msra.mxu0 0.0
    %1738 = vmatpush.msra.mxu0 0.0
    %1739 = vmatpush.msra.mxu0 0.0
    %1740 = vmatpush.msra.mxu0 0.0
    %1741 = vmatpush.msra.mxu0 0.0
    %1742 = vmatpush.msra.mxu0 0.0
    %1743 = vmatpush.msra.mxu0 0.0
    %1744 = vmatpush.msra.mxu0 0.0
    %1745 = vmatpush.msra.mxu0 0.0
    %1746 = vmatpush.msra.mxu0 0.0
    %1747 = vmatpush.msra.mxu0 0.0
    %1748 = vmatpush.msra.mxu0 %v121
    %1749 = vmatpush.msra.mxu0 %v120
    %1750 = vmatpush.msra.mxu0 %v119
    %1751 = vmatpush.msra.mxu0 %v118
    %1752 = vmatmul.f32.gmra.mxu0 %v1569
    %v1753 = vpop.f32.mrf.mxu0
    %v1754 = vadd.f32 0.0, %v1753
    %1755 = vdwg.mxu0
    %1756 = vmatpush.msra.mxu0 0.0
    %1757 = vmatpush.msra.mxu0 0.0
    %1758 = vmatpush.msra.mxu0 0.0
    %1759 = vmatpush.msra.mxu0 0.0
    %1760 = vmatpush.msra.mxu0 0.0
    %1761 = vmatpush.msra.mxu0 0.0
    %1762 = vmatpush.msra.mxu0 0.0
    %1763 = vmatpush.msra.mxu0 0.0
    %1764 = vmatpush.msra.mxu0 0.0
    %1765 = vmatpush.msra.mxu0 0.0
    %1766 = vmatpush.msra.mxu0 0.0
    %1767 = vmatpush.msra.mxu0 0.0
    %1768 = vmatpush.msra.mxu0 0.0
    %1769 = vmatpush.msra.mxu0 0.0
    %1770 = vmatpush.msra.mxu0 %v102
    %1771 = vmatpush.msra.mxu0 %v101
    %1772 = vmatmul.f32.gmra.mxu0 %v1592
    %v1773 = vpop.f32.mrf.mxu0
    %v1774 = vadd.f32 %v1754, %v1773
    %1775 = vdwg.mxu0
    %v1776 = vadd.f32 %v1774, %v139
    %v1777 = vxor.u32 %v1776, 2147483648
    %v1778 = vmul.f32 %v1777, 1.442695
    %v1779 = vpow.pop %v1778
    %v1780 = vadd.f32 %v1779, 1.0
    %v1781 = vrcp.pop %v1780
    %v1782 = vmul.f32 %v1780, %v1781
    %v1783 = vsub.f32 1.0, %v1782
    %v1784 = vmul.f32 %v1781, %v1783
    %v1785 = vadd.f32 %v1781, %v1784
    %vm1786 = vweird.f32 %v1780
    %vm1787 = vweird.f32 %v1781
    %vm1788 = vmor %vm1786, %vm1787
    %v1789 = vsel %vm1788, %v1781, %v1785
    %v1790 = vand.u32 2147483647, %v1780
    %vm1791 = vcmp.eq.f32.partialorder %v1790, 8.507059e+37
    %v1792 = vand.u32 %v1780, 2147483648
    %v1793 = vor.u32 1.1754944e-38, %v1792
    %v1794 = vsel %vm1791, %v1793, %v1789
    %v1795 = vmul.f32 1.0, %v1794
    %v1796 = vmul.f32 %v1693, %v1561
    %v1797 = vmul.f32 %v1633, %v1735
    %v1798 = vadd.f32 %v1796, %v1797
    %v1799 = vtanh.pop %v1798
    %v1800 = vmul.f32 %v1795, %v1799
    %s1801 = scalar_lea.vmem [#allocation12], 12
    %1802 = vst.msk [vmem:[%s1801] sm:$0x3] %vm379, %v1800
    %s1803 = scalar_lea.vmem [#allocation4], 14
    %v1804 = vld [vmem:[%s1803] sm:$0x3]
    %v1806 = vsel %vm144, %v1800, 0
    %1808 = vmatpush.msra.mxu0 0.0
    %1809 = vmatpush.msra.mxu0 0.0
    %1810 = vmatpush.msra.mxu0 0.0
    %1811 = vmatpush.msra.mxu0 0.0
    %1812 = vmatpush.msra.mxu0 0.0
    %1813 = vmatpush.msra.mxu0 0.0
    %1814 = vmatpush.msra.mxu0 0.0
    %1815 = vmatpush.msra.mxu0 0.0
    %1816 = vmatpush.msra.mxu0 0.0
    %1817 = vmatpush.msra.mxu0 0.0
    %1818 = vmatpush.msra.mxu0 0.0
    %1819 = vmatpush.msra.mxu0 0.0
    %1820 = vmatpush.msra.mxu0 %v106
    %1821 = vmatpush.msra.mxu0 %v105
    %1822 = vmatpush.msra.mxu0 %v104
    %1823 = vmatpush.msra.mxu0 %v103
    %1824 = vmatmul.f32.gmra.mxu0 %v1806
    %v1825 = vpop.f32.mrf.mxu0
    %v1826 = vadd.f32 0.0, %v1825
    %1827 = vdwg.mxu0
    %v1829 = vsel %vm168, %v1804, 0
    %1831 = vmatpush.msra.mxu0 0.0
    %1832 = vmatpush.msra.mxu0 0.0
    %1833 = vmatpush.msra.mxu0 0.0
    %1834 = vmatpush.msra.mxu0 0.0
    %1835 = vmatpush.msra.mxu0 0.0
    %1836 = vmatpush.msra.mxu0 0.0
    %1837 = vmatpush.msra.mxu0 0.0
    %1838 = vmatpush.msra.mxu0 0.0
    %1839 = vmatpush.msra.mxu0 0.0
    %1840 = vmatpush.msra.mxu0 0.0
    %1841 = vmatpush.msra.mxu0 0.0
    %1842 = vmatpush.msra.mxu0 0.0
    %1843 = vmatpush.msra.mxu0 0.0
    %1844 = vmatpush.msra.mxu0 0.0
    %1845 = vmatpush.msra.mxu0 %v93
    %1846 = vmatpush.msra.mxu0 %v92
    %1847 = vmatmul.f32.gmra.mxu0 %v1829
    %v1848 = vpop.f32.mrf.mxu0
    %v1849 = vadd.f32 %v1826, %v1848
    %1850 = vdwg.mxu0
    %v1851 = vadd.f32 %v1849, %v124
    %v1852 = vxor.u32 %v1851, 2147483648
    %v1853 = vmul.f32 %v1852, 1.442695
    %v1854 = vpow.pop %v1853
    %v1855 = vadd.f32 %v1854, 1.0
    %v1856 = vrcp.pop %v1855
    %v1857 = vmul.f32 %v1855, %v1856
    %v1858 = vsub.f32 1.0, %v1857
    %v1859 = vmul.f32 %v1856, %v1858
    %v1860 = vadd.f32 %v1856, %v1859
    %vm1861 = vweird.f32 %v1855
    %vm1862 = vweird.f32 %v1856
    %vm1863 = vmor %vm1861, %vm1862
    %v1864 = vsel %vm1863, %v1856, %v1860
    %v1865 = vand.u32 2147483647, %v1855
    %vm1866 = vcmp.eq.f32.partialorder %v1865, 8.507059e+37
    %v1867 = vand.u32 %v1855, 2147483648
    %v1868 = vor.u32 1.1754944e-38, %v1867
    %v1869 = vsel %vm1866, %v1868, %v1864
    %v1870 = vmul.f32 1.0, %v1869
    %1871 = vmatpush.msra.mxu0 0.0
    %1872 = vmatpush.msra.mxu0 0.0
    %1873 = vmatpush.msra.mxu0 0.0
    %1874 = vmatpush.msra.mxu0 0.0
    %1875 = vmatpush.msra.mxu0 0.0
    %1876 = vmatpush.msra.mxu0 0.0
    %1877 = vmatpush.msra.mxu0 0.0
    %1878 = vmatpush.msra.mxu0 0.0
    %1879 = vmatpush.msra.mxu0 0.0
    %1880 = vmatpush.msra.mxu0 0.0
    %1881 = vmatpush.msra.mxu0 0.0
    %1882 = vmatpush.msra.mxu0 0.0
    %1883 = vmatpush.msra.mxu0 %v111
    %1884 = vmatpush.msra.mxu0 %v110
    %1885 = vmatpush.msra.mxu0 %v109
    %1886 = vmatpush.msra.mxu0 %v108
    %1887 = vmatmul.f32.gmra.mxu0 %v1806
    %v1888 = vpop.f32.mrf.mxu0
    %v1889 = vadd.f32 0.0, %v1888
    %1890 = vdwg.mxu0
    %1891 = vmatpush.msra.mxu0 0.0
    %1892 = vmatpush.msra.mxu0 0.0
    %1893 = vmatpush.msra.mxu0 0.0
    %1894 = vmatpush.msra.mxu0 0.0
    %1895 = vmatpush.msra.mxu0 0.0
    %1896 = vmatpush.msra.mxu0 0.0
    %1897 = vmatpush.msra.mxu0 0.0
    %1898 = vmatpush.msra.mxu0 0.0
    %1899 = vmatpush.msra.mxu0 0.0
    %1900 = vmatpush.msra.mxu0 0.0
    %1901 = vmatpush.msra.mxu0 0.0
    %1902 = vmatpush.msra.mxu0 0.0
    %1903 = vmatpush.msra.mxu0 0.0
    %1904 = vmatpush.msra.mxu0 0.0
    %1905 = vmatpush.msra.mxu0 %v96
    %1906 = vmatpush.msra.mxu0 %v95
    %1907 = vmatmul.f32.gmra.mxu0 %v1829
    %v1908 = vpop.f32.mrf.mxu0
    %v1909 = vadd.f32 %v1889, %v1908
    %1910 = vdwg.mxu0
    %v1911 = vadd.f32 %v1909, %v129
    %v1912 = vxor.u32 %v1911, 2147483648
    %v1913 = vmul.f32 %v1912, 1.442695
    %v1914 = vpow.pop %v1913
    %v1915 = vadd.f32 %v1914, 1.0
    %v1916 = vrcp.pop %v1915
    %v1917 = vmul.f32 %v1915, %v1916
    %v1918 = vsub.f32 1.0, %v1917
    %v1919 = vmul.f32 %v1916, %v1918
    %v1920 = vadd.f32 %v1916, %v1919
    %vm1921 = vweird.f32 %v1915
    %vm1922 = vweird.f32 %v1916
    %vm1923 = vmor %vm1921, %vm1922
    %v1924 = vsel %vm1923, %v1916, %v1920
    %v1925 = vand.u32 2147483647, %v1915
    %vm1926 = vcmp.eq.f32.partialorder %v1925, 8.507059e+37
    %v1927 = vand.u32 %v1915, 2147483648
    %v1928 = vor.u32 1.1754944e-38, %v1927
    %v1929 = vsel %vm1926, %v1928, %v1924
    %v1930 = vmul.f32 1.0, %v1929
    %1931 = vmatpush.msra.mxu0 0.0
    %1932 = vmatpush.msra.mxu0 0.0
    %1933 = vmatpush.msra.mxu0 0.0
    %1934 = vmatpush.msra.mxu0 0.0
    %1935 = vmatpush.msra.mxu0 0.0
    %1936 = vmatpush.msra.mxu0 0.0
    %1937 = vmatpush.msra.mxu0 0.0
    %1938 = vmatpush.msra.mxu0 0.0
    %1939 = vmatpush.msra.mxu0 0.0
    %1940 = vmatpush.msra.mxu0 0.0
    %1941 = vmatpush.msra.mxu0 0.0
    %1942 = vmatpush.msra.mxu0 0.0
    %1943 = vmatpush.msra.mxu0 %v116
    %1944 = vmatpush.msra.mxu0 %v115
    %1945 = vmatpush.msra.mxu0 %v114
    %1946 = vmatpush.msra.mxu0 %v113
    %1947 = vmatmul.f32.gmra.mxu0 %v1806
    %v1948 = vpop.f32.mrf.mxu0
    %v1949 = vadd.f32 0.0, %v1948
    %1950 = vdwg.mxu0
    %1951 = vmatpush.msra.mxu0 0.0
    %1952 = vmatpush.msra.mxu0 0.0
    %1953 = vmatpush.msra.mxu0 0.0
    %1954 = vmatpush.msra.mxu0 0.0
    %1955 = vmatpush.msra.mxu0 0.0
    %1956 = vmatpush.msra.mxu0 0.0
    %1957 = vmatpush.msra.mxu0 0.0
    %1958 = vmatpush.msra.mxu0 0.0
    %1959 = vmatpush.msra.mxu0 0.0
    %1960 = vmatpush.msra.mxu0 0.0
    %1961 = vmatpush.msra.mxu0 0.0
    %1962 = vmatpush.msra.mxu0 0.0
    %1963 = vmatpush.msra.mxu0 0.0
    %1964 = vmatpush.msra.mxu0 0.0
    %1965 = vmatpush.msra.mxu0 %v99
    %1966 = vmatpush.msra.mxu0 %v98
    %1967 = vmatmul.f32.gmra.mxu0 %v1829
    %v1968 = vpop.f32.mrf.mxu0
    %v1969 = vadd.f32 %v1949, %v1968
    %1970 = vdwg.mxu0
    %v1971 = vadd.f32 %v1969, %v134
    %v1972 = vtanh.pop %v1971
    %1973 = vmatpush.msra.mxu0 0.0
    %1974 = vmatpush.msra.mxu0 0.0
    %1975 = vmatpush.msra.mxu0 0.0
    %1976 = vmatpush.msra.mxu0 0.0
    %1977 = vmatpush.msra.mxu0 0.0
    %1978 = vmatpush.msra.mxu0 0.0
    %1979 = vmatpush.msra.mxu0 0.0
    %1980 = vmatpush.msra.mxu0 0.0
    %1981 = vmatpush.msra.mxu0 0.0
    %1982 = vmatpush.msra.mxu0 0.0
    %1983 = vmatpush.msra.mxu0 0.0
    %1984 = vmatpush.msra.mxu0 0.0
    %1985 = vmatpush.msra.mxu0 %v121
    %1986 = vmatpush.msra.mxu0 %v120
    %1987 = vmatpush.msra.mxu0 %v119
    %1988 = vmatpush.msra.mxu0 %v118
    %1989 = vmatmul.f32.gmra.mxu0 %v1806
    %v1990 = vpop.f32.mrf.mxu0
    %v1991 = vadd.f32 0.0, %v1990
    %1992 = vdwg.mxu0
    %1993 = vmatpush.msra.mxu0 0.0
    %1994 = vmatpush.msra.mxu0 0.0
    %1995 = vmatpush.msra.mxu0 0.0
    %1996 = vmatpush.msra.mxu0 0.0
    %1997 = vmatpush.msra.mxu0 0.0
    %1998 = vmatpush.msra.mxu0 0.0
    %1999 = vmatpush.msra.mxu0 0.0
    %2000 = vmatpush.msra.mxu0 0.0
    %2001 = vmatpush.msra.mxu0 0.0
    %2002 = vmatpush.msra.mxu0 0.0
    %2003 = vmatpush.msra.mxu0 0.0
    %2004 = vmatpush.msra.mxu0 0.0
    %2005 = vmatpush.msra.mxu0 0.0
    %2006 = vmatpush.msra.mxu0 0.0
    %2007 = vmatpush.msra.mxu0 %v102
    %2008 = vmatpush.msra.mxu0 %v101
    %2009 = vmatmul.f32.gmra.mxu0 %v1829
    %v2010 = vpop.f32.mrf.mxu0
    %v2011 = vadd.f32 %v1991, %v2010
    %2012 = vdwg.mxu0
    %v2013 = vadd.f32 %v2011, %v139
    %v2014 = vxor.u32 %v2013, 2147483648
    %v2015 = vmul.f32 %v2014, 1.442695
    %v2016 = vpow.pop %v2015
    %v2017 = vadd.f32 %v2016, 1.0
    %v2018 = vrcp.pop %v2017
    %v2019 = vmul.f32 %v2017, %v2018
    %v2020 = vsub.f32 1.0, %v2019
    %v2021 = vmul.f32 %v2018, %v2020
    %v2022 = vadd.f32 %v2018, %v2021
    %vm2023 = vweird.f32 %v2017
    %vm2024 = vweird.f32 %v2018
    %vm2025 = vmor %vm2023, %vm2024
    %v2026 = vsel %vm2025, %v2018, %v2022
    %v2027 = vand.u32 2147483647, %v2017
    %vm2028 = vcmp.eq.f32.partialorder %v2027, 8.507059e+37
    %v2029 = vand.u32 %v2017, 2147483648
    %v2030 = vor.u32 1.1754944e-38, %v2029
    %v2031 = vsel %vm2028, %v2030, %v2026
    %v2032 = vmul.f32 1.0, %v2031
    %v2033 = vmul.f32 %v1930, %v1798
    %v2034 = vmul.f32 %v1870, %v1972
    %v2035 = vadd.f32 %v2033, %v2034
    %v2036 = vtanh.pop %v2035
    %v2037 = vmul.f32 %v2032, %v2036
    %s2038 = scalar_lea.vmem [#allocation12], 14
    %2039 = vst.msk [vmem:[%s2038] sm:$0x3] %vm379, %v2037
    %2040 = vst.msk [vmem:[#allocation2] sm:$0x3] %vm379, %v2037
    %2041 = vst.msk [vmem:[#allocation3] sm:$0x3] %vm379, %v2035
    // Predicated region
    $region38: #{tpu_custom_call.1} parent=1 // pred_check
      %p2042 = pneg %p85
    $region39: #{tpu_custom_call.1} parent=1 // pred_check_branch
      %2044 = sbr.rel (%p2042) target = $region41
    $region40: #{tpu_custom_call.1} parent=1 // pred_region
      %2045 = vst.msk [vmem:[#allocation13] sm:$0x3] %vm379, %v2037
      %2046 = vst.msk [vmem:[#allocation15] sm:$0x3] %vm379, %v2035
    $region41: #{tpu_custom_call.1} parent=1 // pred_fallthru
      _
    // Predicated region
    $region42: #{tpu_custom_call.1} parent=1 // pred_check
      _
    $region43: #{tpu_custom_call.1} parent=1 // pred_check_branch
      %2048 = sbr.rel (0) target = $region45
    $region44: #{tpu_custom_call.1} parent=1 // pred_region
      %2050 = vsyncadd [#allocation6], 0
      %s2051 = sshll.u32 [#allocation12], 4
      %s2052 = int_to_ptr.vmem [resolvable:$true] %s2051
      %s2053 = sshll.u32 %s4, 4
      %s2054 = int_to_ptr.hbm [resolvable:$true] %s2053
      %2059 = dma.vmem_to_hbm [thread:$0]  %s2052, 256, %s2054, [#allocation6], 32, 32, 2
    $region45: #{tpu_custom_call.1} parent=1 // pred_fallthru
      _
    // Predicated region
    $region46: #{tpu_custom_call.1} parent=1 // pred_check
      _
    $region47: #{tpu_custom_call.1} parent=1 // pred_check_branch
      %2061 = sbr.rel (0) target = $region49
    $region48: #{tpu_custom_call.1} parent=1 // pred_region
      %2063 = vsyncadd [#allocation14], 0
      %s2065 = sshll.u32 [#allocation13], 4
      %s2066 = int_to_ptr.vmem [resolvable:$true] %s2065
      %s2067 = sshll.u32 %s5, 4
      %s2068 = int_to_ptr.hbm [resolvable:$true] %s2067
      %2070 = dma.vmem_to_hbm [thread:$0]  %s2066, 32, %s2068, [#allocation14]
    $region49: #{tpu_custom_call.1} parent=1 // pred_fallthru
      _
    // Predicated region
    $region50: #{tpu_custom_call.1} parent=1 // pred_check
      _
    $region51: #{tpu_custom_call.1} parent=1 // pred_check_branch
      %2072 = sbr.rel (0) target = $region53
    $region52: #{tpu_custom_call.1} parent=1 // pred_region
      %2074 = vsyncadd [#allocation14], 0
      %s2076 = sshll.u32 [#allocation15], 4
      %s2077 = int_to_ptr.vmem [resolvable:$true] %s2076
      %s2078 = sshll.u32 %s6, 4
      %s2079 = int_to_ptr.hbm [resolvable:$true] %s2078
      %2081 = dma.vmem_to_hbm [thread:$0]  %s2077, 32, %s2079, [#allocation14]
    $region53: #{tpu_custom_call.1} parent=1 // pred_fallthru
      _
    // Predicated region
    $region54: #{tpu_custom_call.1} parent=1 // pred_check
      _
    $region55: #{tpu_custom_call.1} parent=1 // pred_check_branch
      %2083 = sbr.rel (0) target = $region57
    $region56: #{tpu_custom_call.1} parent=1 // pred_region
      %2085 = dma.done [#allocation6], 256
    $region57: #{tpu_custom_call.1} parent=1 // pred_fallthru
      _
    // Predicated region
    $region58: #{tpu_custom_call.1} parent=1 // pred_check
      _
    $region59: #{tpu_custom_call.1} parent=1 // pred_check_branch
      %2087 = sbr.rel (0) target = $region61
    $region60: #{tpu_custom_call.1} parent=1 // pred_region
      %2089 = dma.done [#allocation14], 32
    $region61: #{tpu_custom_call.1} parent=1 // pred_fallthru
      _
    // Predicated region
    $region62: #{tpu_custom_call.1} parent=1 // pred_check
      _
    $region63: #{tpu_custom_call.1} parent=1 // pred_check_branch
      %2091 = sbr.rel (0) target = $region65
    $region64: #{tpu_custom_call.1} parent=1 // pred_region
      %2093 = dma.done [#allocation14], 32
    $region65: #{tpu_custom_call.1} parent=1 // pred_fallthru
      _
    %2094 = vsyncpa [#allocation5], 1
    %2095 = vsyncpa [#allocation8], 1
    %2096 = vsyncpa [#allocation11], 1
    %2097 = vsyncpa [#allocation6], 1
    %2098 = vsyncpa [#allocation14], 1

</llo_original>
